<compile_context>
chip_gen: v5e
topology: v5e:2x2
jax: 0.10.0
libtpu: 0.0.40
codegen_flags: <defaults>
</compile_context>

<pallas_src>
import functools

import jax
import jax.numpy as jnp
from jax import lax
from jax.experimental import pallas as pl
from jax.experimental.pallas import tpu as pltpu

SEQ_LEN = 22
INPUT_DIM = 400
HIDDEN = 64


def _gru_fc_kernel(x_ref, wih_ref, whh_ref, bih_ref, bhh_ref,
                   wfc_ref, bfc_ref, out_ref):
    """Whole GRU + FC forward in one invocation.

    x_ref   : (T*B, 400) bf16  time-major flattened input
    wih_ref : (400, 3H)  bf16  W_ih^T, gate order r | z | n
    whh_ref : (64, 3H)   bf16  W_hh^T
    bih_ref : (1, 3H)    f32   b_ih
    bhh_ref : (1, 3H)    f32   b_hh
    wfc_ref : (64, C)    f32   W_fc^T
    bfc_ref : (1, C)     f32   b_fc
    out_ref : (B, C)     f32
    """
    H = HIDDEN
    T = SEQ_LEN
    B = x_ref.shape[0] // T

    # Hoisted, non-recurrent input projection: one big MXU matmul over all
    # time steps (bf16 in, f32 accumulate), + b_ih folded in once.
    xw = jnp.dot(x_ref[...], wih_ref[...],
                 preferred_element_type=jnp.float32) + bih_ref[...]  # (T*B, 3H)

    whh = whh_ref[...]
    bhh = bhh_ref[...]

    h = jnp.zeros((B, H), jnp.float32)
    # Fully unrolled recurrence; rows [t*B:(t+1)*B] of xw are time step t.
    for t in range(T):
        gi = xw[t * B:(t + 1) * B, :]                                 # (B, 3H)
        gh = jnp.dot(h.astype(jnp.bfloat16), whh,
                     preferred_element_type=jnp.float32) + bhh        # (B, 3H)
        # r and z (sigmoid) are adjacent in lanes [0 : 2H] -> one dispatch.
        rz = jax.nn.sigmoid(gi[:, :2 * H] + gh[:, :2 * H])            # (B, 2H)
        r = rz[:, :H]
        z = rz[:, H:]
        # PyTorch GRU: n = tanh(W_in x + b_in + r * (W_hn h + b_hn))
        n = jnp.tanh(gi[:, 2 * H:] + r * gh[:, 2 * H:])               # (B, H)
        h = (1.0 - z) * n + z * h

    # Fused FC on the final hidden state (f32 throughout).
    out_ref[...] = (
        jnp.dot(h, wfc_ref[...], preferred_element_type=jnp.float32)
        + bfc_ref[...]
    ).astype(out_ref.dtype)


@functools.partial(jax.jit, static_argnames=("num_classes",))
def widar_gru_forward(x, params, num_classes):
    """Pallas implementation of Widar_GRU.forward."""
    w_ih, w_hh = params["w_ih"], params["w_hh"]
    b_ih, b_hh = params["b_ih"], params["b_hh"]
    w_fc, b_fc = params["w_fc"], params["b_fc"]

    # view(-1, 22, 400) then permute(1, 0, 2): expressed as a bf16 cast +
    # time-major flatten (moves ~35 KB; every in-kernel access then becomes a
    # contiguous 2-D row slice and the projection is a single MXU matmul).
    x = x.reshape(-1, SEQ_LEN, INPUT_DIM).astype(jnp.bfloat16)
    B = x.shape[0]
    x_tm = jnp.transpose(x, (1, 0, 2)).reshape(SEQ_LEN * B, INPUT_DIM)

    wih_t = jnp.transpose(w_ih).astype(jnp.bfloat16)            # (400, 3H)
    whh_t = jnp.transpose(w_hh).astype(jnp.bfloat16)            # (64, 3H)
    bih = b_ih.reshape(1, 3 * HIDDEN).astype(jnp.float32)
    bhh = b_hh.reshape(1, 3 * HIDDEN).astype(jnp.float32)
    wfc_t = jnp.transpose(w_fc).astype(jnp.float32)             # (64, C)
    bfc = b_fc.reshape(1, num_classes).astype(jnp.float32)

    vmem = lambda: pl.BlockSpec(memory_space=pltpu.MemorySpace.VMEM)
    out = pl.pallas_call(
        _gru_fc_kernel,
        out_shape=jax.ShapeDtypeStruct((B, num_classes), jnp.float32),
        in_specs=[vmem() for _ in range(7)],
        out_specs=vmem(),
        # Single invocation: no grid, no per-step pipeline overhead.
    )(x_tm, wih_t, whh_t, bih, bhh, wfc_t, bfc)
    return out


def init_params(key, num_classes):
    """Deterministic init matching nn.GRU(400, 64) / nn.Linear(64, C) shapes."""
    k = jax.random.split(key, 6)
    s = 1.0 / jnp.sqrt(HIDDEN)
    return {
        # PyTorch GRU gate order: r, z, n
        "w_ih": jax.random.uniform(k[0], (3 * HIDDEN, INPUT_DIM),
                                   jnp.float32, -s, s),
        "w_hh": jax.random.uniform(k[1], (3 * HIDDEN, HIDDEN),
                                   jnp.float32, -s, s),
        "b_ih": jax.random.uniform(k[2], (3 * HIDDEN,), jnp.float32, -s, s),
        "b_hh": jax.random.uniform(k[3], (3 * HIDDEN,), jnp.float32, -s, s),
        "w_fc": jax.random.uniform(k[4], (num_classes, HIDDEN),
                                   jnp.float32, -s, s),
        "b_fc": jax.random.uniform(k[5], (num_classes,), jnp.float32, -s, s),
    }


def reference_forward(x, params, num_classes):
    """Pure-JAX fp32 reference (lax.scan GRU) matching nn.GRU semantics."""
    w_ih, w_hh = params["w_ih"], params["w_hh"]
    b_ih, b_hh = params["b_ih"], params["b_hh"]
    w_fc, b_fc = params["w_fc"], params["b_fc"]
    H = HIDDEN

    x = x.reshape(-1, SEQ_LEN, INPUT_DIM).astype(jnp.float32)
    x_tm = jnp.transpose(x, (1, 0, 2))          # (T, B, D)
    B = x.shape[0]
    h0 = jnp.zeros((B, H), jnp.float32)

    def step(h, x_t):
        gi = x_t @ w_ih.T + b_ih
        gh = h @ w_hh.T + b_hh
        r = jax.nn.sigmoid(gi[:, :H] + gh[:, :H])
        z = jax.nn.sigmoid(gi[:, H:2 * H] + gh[:, H:2 * H])
        n = jnp.tanh(gi[:, 2 * H:] + r * gh[:, 2 * H:])
        return (1.0 - z) * n + z * h, None

    h_last, _ = lax.scan(step, h0, x_tm)
    return h_last @ w_fc.T + b_fc


if __name__ == "__main__":
    num_classes = 6
    batch = 2

    key = jax.random.PRNGKey(0)
    k_x, k_p = jax.random.split(key)
    x = jax.random.normal(k_x, (batch, SEQ_LEN, INPUT_DIM), jnp.float32)
    params = init_params(k_p, num_classes)

    out = widar_gru_forward(x, params, num_classes)
    out = jax.block_until_ready(out)

    ref = reference_forward(x, params, num_classes)
    assert out.shape == (batch, num_classes)
    # bf16 MXU operands (f32 accumulation) vs. a full-fp32 reference -> the
    # tolerance is looser than the previous fp32-only version.
    assert jnp.allclose(out, ref, atol=5e-2, rtol=5e-2), (
        float(jnp.max(jnp.abs(out - ref))))

    print("KERNEL_OK")
</pallas_src>

<mosaic_0001>
module attributes {stable_mosaic.version = 11 : i64} {
  func.func @_gru_fc_kernel(%arg0: memref<44x400xbf16, #tpu.memory_space<vmem>>, %arg1: memref<400x192xbf16, #tpu.memory_space<vmem>>, %arg2: memref<64x192xbf16, #tpu.memory_space<vmem>>, %arg3: memref<1x192xf32, #tpu.memory_space<vmem>>, %arg4: memref<1x192xf32, #tpu.memory_space<vmem>>, %arg5: memref<64x6xf32, #tpu.memory_space<vmem>>, %arg6: memref<1x6xf32, #tpu.memory_space<vmem>>, %arg7: memref<2x6xf32, #tpu.memory_space<vmem>>) attributes {dimension_semantics = [], scalar_prefetch = 0 : i64, scratch_operands = 0 : i64, tpu.core_type = #tpu.core_type<tc>} {
    %c0 = arith.constant 0 : index
    %c0_0 = arith.constant 0 : index
    %0 = vector.load %arg0[%c0, %c0_0] : memref<44x400xbf16, #tpu.memory_space<vmem>>, vector<44x400xbf16>
    %c0_1 = arith.constant 0 : index
    %c0_2 = arith.constant 0 : index
    %1 = vector.load %arg1[%c0_1, %c0_2] : memref<400x192xbf16, #tpu.memory_space<vmem>>, vector<400x192xbf16>
    %cst = arith.constant dense<0.000000e+00> : vector<44x192xf32>
    %2 = tpu.matmul %0, %1, %cst {dimension_numbers = #tpu.dot_dimension_numbers<[1], [0], [0], [1], [0, 0, 1, 1], [], []>} : vector<44x400xbf16>, vector<400x192xbf16>, vector<44x192xf32> -> vector<44x192xf32>
    %c0_3 = arith.constant 0 : index
    %c0_4 = arith.constant 0 : index
    %3 = vector.load %arg3[%c0_3, %c0_4] : memref<1x192xf32, #tpu.memory_space<vmem>>, vector<1x192xf32>
    %4 = vector.broadcast %3 : vector<1x192xf32> to vector<44x192xf32>
    %5 = arith.addf %2, %4 : vector<44x192xf32>
    %c0_5 = arith.constant 0 : index
    %c0_6 = arith.constant 0 : index
    %6 = vector.load %arg2[%c0_5, %c0_6] : memref<64x192xbf16, #tpu.memory_space<vmem>>, vector<64x192xbf16>
    %c0_7 = arith.constant 0 : index
    %c0_8 = arith.constant 0 : index
    %7 = vector.load %arg4[%c0_7, %c0_8] : memref<1x192xf32, #tpu.memory_space<vmem>>, vector<1x192xf32>
    %cst_9 = arith.constant 0.000000e+00 : f32
    %8 = vector.broadcast %cst_9 : f32 to vector<2x64xf32>
    %9 = vector.extract_strided_slice %5 {offsets = [0, 0], sizes = [2, 192], strides = [1, 1]} : vector<44x192xf32> to vector<2x192xf32>
    %10 = arith.truncf %8 : vector<2x64xf32> to vector<2x64xbf16>
    %cst_10 = arith.constant dense<0.000000e+00> : vector<2x192xf32>
    %11 = tpu.matmul %10, %6, %cst_10 {dimension_numbers = #tpu.dot_dimension_numbers<[1], [0], [0], [1], [0, 0, 1, 1], [], []>} : vector<2x64xbf16>, vector<64x192xbf16>, vector<2x192xf32> -> vector<2x192xf32>
    %12 = vector.broadcast %7 : vector<1x192xf32> to vector<2x192xf32>
    %13 = arith.addf %11, %12 : vector<2x192xf32>
    %14 = vector.extract_strided_slice %9 {offsets = [0, 0], sizes = [2, 128], strides = [1, 1]} : vector<2x192xf32> to vector<2x128xf32>
    %15 = vector.extract_strided_slice %13 {offsets = [0, 0], sizes = [2, 128], strides = [1, 1]} : vector<2x192xf32> to vector<2x128xf32>
    %16 = arith.addf %14, %15 : vector<2x128xf32>
    %17 = arith.negf %16 : vector<2x128xf32>
    %18 = math.exp %17 : vector<2x128xf32>
    %cst_11 = arith.constant 1.000000e+00 : f32
    %19 = vector.broadcast %cst_11 : f32 to vector<2x128xf32>
    %20 = arith.addf %19, %18 : vector<2x128xf32>
    %21 = arith.divf %19, %20 : vector<2x128xf32>
    %22 = vector.extract_strided_slice %21 {offsets = [0, 0], sizes = [2, 64], strides = [1, 1]} : vector<2x128xf32> to vector<2x64xf32>
    %23 = vector.extract_strided_slice %21 {offsets = [0, 64], sizes = [2, 64], strides = [1, 1]} : vector<2x128xf32> to vector<2x64xf32>
    %24 = vector.extract_strided_slice %9 {offsets = [0, 128], sizes = [2, 64], strides = [1, 1]} : vector<2x192xf32> to vector<2x64xf32>
    %25 = vector.extract_strided_slice %13 {offsets = [0, 128], sizes = [2, 64], strides = [1, 1]} : vector<2x192xf32> to vector<2x64xf32>
    %26 = arith.mulf %22, %25 : vector<2x64xf32>
    %27 = arith.addf %24, %26 : vector<2x64xf32>
    %28 = math.tanh %27 : vector<2x64xf32>
    %cst_12 = arith.constant 1.000000e+00 : f32
    %29 = vector.broadcast %cst_12 : f32 to vector<2x64xf32>
    %30 = arith.subf %29, %23 : vector<2x64xf32>
    %31 = arith.mulf %30, %28 : vector<2x64xf32>
    %32 = arith.mulf %23, %8 : vector<2x64xf32>
    %33 = arith.addf %31, %32 : vector<2x64xf32>
    %34 = vector.extract_strided_slice %5 {offsets = [2, 0], sizes = [2, 192], strides = [1, 1]} : vector<44x192xf32> to vector<2x192xf32>
    %35 = arith.truncf %33 : vector<2x64xf32> to vector<2x64xbf16>
    %cst_13 = arith.constant dense<0.000000e+00> : vector<2x192xf32>
    %36 = tpu.matmul %35, %6, %cst_13 {dimension_numbers = #tpu.dot_dimension_numbers<[1], [0], [0], [1], [0, 0, 1, 1], [], []>} : vector<2x64xbf16>, vector<64x192xbf16>, vector<2x192xf32> -> vector<2x192xf32>
    %37 = vector.broadcast %7 : vector<1x192xf32> to vector<2x192xf32>
    %38 = arith.addf %36, %37 : vector<2x192xf32>
    %39 = vector.extract_strided_slice %34 {offsets = [0, 0], sizes = [2, 128], strides = [1, 1]} : vector<2x192xf32> to vector<2x128xf32>
    %40 = vector.extract_strided_slice %38 {offsets = [0, 0], sizes = [2, 128], strides = [1, 1]} : vector<2x192xf32> to vector<2x128xf32>
    %41 = arith.addf %39, %40 : vector<2x128xf32>
    %42 = arith.negf %41 : vector<2x128xf32>
    %43 = math.exp %42 : vector<2x128xf32>
    %cst_14 = arith.constant 1.000000e+00 : f32
    %44 = vector.broadcast %cst_14 : f32 to vector<2x128xf32>
    %45 = arith.addf %44, %43 : vector<2x128xf32>
    %46 = arith.divf %44, %45 : vector<2x128xf32>
    %47 = vector.extract_strided_slice %46 {offsets = [0, 0], sizes = [2, 64], strides = [1, 1]} : vector<2x128xf32> to vector<2x64xf32>
    %48 = vector.extract_strided_slice %46 {offsets = [0, 64], sizes = [2, 64], strides = [1, 1]} : vector<2x128xf32> to vector<2x64xf32>
    %49 = vector.extract_strided_slice %34 {offsets = [0, 128], sizes = [2, 64], strides = [1, 1]} : vector<2x192xf32> to vector<2x64xf32>
    %50 = vector.extract_strided_slice %38 {offsets = [0, 128], sizes = [2, 64], strides = [1, 1]} : vector<2x192xf32> to vector<2x64xf32>
    %51 = arith.mulf %47, %50 : vector<2x64xf32>
    %52 = arith.addf %49, %51 : vector<2x64xf32>
    %53 = math.tanh %52 : vector<2x64xf32>
    %cst_15 = arith.constant 1.000000e+00 : f32
    %54 = vector.broadcast %cst_15 : f32 to vector<2x64xf32>
    %55 = arith.subf %54, %48 : vector<2x64xf32>
    %56 = arith.mulf %55, %53 : vector<2x64xf32>
    %57 = arith.mulf %48, %33 : vector<2x64xf32>
    %58 = arith.addf %56, %57 : vector<2x64xf32>
    %59 = vector.extract_strided_slice %5 {offsets = [4, 0], sizes = [2, 192], strides = [1, 1]} : vector<44x192xf32> to vector<2x192xf32>
    %60 = arith.truncf %58 : vector<2x64xf32> to vector<2x64xbf16>
    %cst_16 = arith.constant dense<0.000000e+00> : vector<2x192xf32>
    %61 = tpu.matmul %60, %6, %cst_16 {dimension_numbers = #tpu.dot_dimension_numbers<[1], [0], [0], [1], [0, 0, 1, 1], [], []>} : vector<2x64xbf16>, vector<64x192xbf16>, vector<2x192xf32> -> vector<2x192xf32>
    %62 = vector.broadcast %7 : vector<1x192xf32> to vector<2x192xf32>
    %63 = arith.addf %61, %62 : vector<2x192xf32>
    %64 = vector.extract_strided_slice %59 {offsets = [0, 0], sizes = [2, 128], strides = [1, 1]} : vector<2x192xf32> to vector<2x128xf32>
    %65 = vector.extract_strided_slice %63 {offsets = [0, 0], sizes = [2, 128], strides = [1, 1]} : vector<2x192xf32> to vector<2x128xf32>
    %66 = arith.addf %64, %65 : vector<2x128xf32>
    %67 = arith.negf %66 : vector<2x128xf32>
    %68 = math.exp %67 : vector<2x128xf32>
    %cst_17 = arith.constant 1.000000e+00 : f32
    %69 = vector.broadcast %cst_17 : f32 to vector<2x128xf32>
    %70 = arith.addf %69, %68 : vector<2x128xf32>
    %71 = arith.divf %69, %70 : vector<2x128xf32>
    %72 = vector.extract_strided_slice %71 {offsets = [0, 0], sizes = [2, 64], strides = [1, 1]} : vector<2x128xf32> to vector<2x64xf32>
    %73 = vector.extract_strided_slice %71 {offsets = [0, 64], sizes = [2, 64], strides = [1, 1]} : vector<2x128xf32> to vector<2x64xf32>
    %74 = vector.extract_strided_slice %59 {offsets = [0, 128], sizes = [2, 64], strides = [1, 1]} : vector<2x192xf32> to vector<2x64xf32>
    %75 = vector.extract_strided_slice %63 {offsets = [0, 128], sizes = [2, 64], strides = [1, 1]} : vector<2x192xf32> to vector<2x64xf32>
    %76 = arith.mulf %72, %75 : vector<2x64xf32>
    %77 = arith.addf %74, %76 : vector<2x64xf32>
    %78 = math.tanh %77 : vector<2x64xf32>
    %cst_18 = arith.constant 1.000000e+00 : f32
    %79 = vector.broadcast %cst_18 : f32 to vector<2x64xf32>
    %80 = arith.subf %79, %73 : vector<2x64xf32>
    %81 = arith.mulf %80, %78 : vector<2x64xf32>
    %82 = arith.mulf %73, %58 : vector<2x64xf32>
    %83 = arith.addf %81, %82 : vector<2x64xf32>
    %84 = vector.extract_strided_slice %5 {offsets = [6, 0], sizes = [2, 192], strides = [1, 1]} : vector<44x192xf32> to vector<2x192xf32>
    %85 = arith.truncf %83 : vector<2x64xf32> to vector<2x64xbf16>
    %cst_19 = arith.constant dense<0.000000e+00> : vector<2x192xf32>
    %86 = tpu.matmul %85, %6, %cst_19 {dimension_numbers = #tpu.dot_dimension_numbers<[1], [0], [0], [1], [0, 0, 1, 1], [], []>} : vector<2x64xbf16>, vector<64x192xbf16>, vector<2x192xf32> -> vector<2x192xf32>
    %87 = vector.broadcast %7 : vector<1x192xf32> to vector<2x192xf32>
    %88 = arith.addf %86, %87 : vector<2x192xf32>
    %89 = vector.extract_strided_slice %84 {offsets = [0, 0], sizes = [2, 128], strides = [1, 1]} : vector<2x192xf32> to vector<2x128xf32>
    %90 = vector.extract_strided_slice %88 {offsets = [0, 0], sizes = [2, 128], strides = [1, 1]} : vector<2x192xf32> to vector<2x128xf32>
    %91 = arith.addf %89, %90 : vector<2x128xf32>
    %92 = arith.negf %91 : vector<2x128xf32>
    %93 = math.exp %92 : vector<2x128xf32>
    %cst_20 = arith.constant 1.000000e+00 : f32
    %94 = vector.broadcast %cst_20 : f32 to vector<2x128xf32>
    %95 = arith.addf %94, %93 : vector<2x128xf32>
    %96 = arith.divf %94, %95 : vector<2x128xf32>
    %97 = vector.extract_strided_slice %96 {offsets = [0, 0], sizes = [2, 64], strides = [1, 1]} : vector<2x128xf32> to vector<2x64xf32>
    %98 = vector.extract_strided_slice %96 {offsets = [0, 64], sizes = [2, 64], strides = [1, 1]} : vector<2x128xf32> to vector<2x64xf32>
    %99 = vector.extract_strided_slice %84 {offsets = [0, 128], sizes = [2, 64], strides = [1, 1]} : vector<2x192xf32> to vector<2x64xf32>
    %100 = vector.extract_strided_slice %88 {offsets = [0, 128], sizes = [2, 64], strides = [1, 1]} : vector<2x192xf32> to vector<2x64xf32>
    %101 = arith.mulf %97, %100 : vector<2x64xf32>
    %102 = arith.addf %99, %101 : vector<2x64xf32>
    %103 = math.tanh %102 : vector<2x64xf32>
    %cst_21 = arith.constant 1.000000e+00 : f32
    %104 = vector.broadcast %cst_21 : f32 to vector<2x64xf32>
    %105 = arith.subf %104, %98 : vector<2x64xf32>
    %106 = arith.mulf %105, %103 : vector<2x64xf32>
    %107 = arith.mulf %98, %83 : vector<2x64xf32>
    %108 = arith.addf %106, %107 : vector<2x64xf32>
    %109 = vector.extract_strided_slice %5 {offsets = [8, 0], sizes = [2, 192], strides = [1, 1]} : vector<44x192xf32> to vector<2x192xf32>
    %110 = arith.truncf %108 : vector<2x64xf32> to vector<2x64xbf16>
    %cst_22 = arith.constant dense<0.000000e+00> : vector<2x192xf32>
    %111 = tpu.matmul %110, %6, %cst_22 {dimension_numbers = #tpu.dot_dimension_numbers<[1], [0], [0], [1], [0, 0, 1, 1], [], []>} : vector<2x64xbf16>, vector<64x192xbf16>, vector<2x192xf32> -> vector<2x192xf32>
    %112 = vector.broadcast %7 : vector<1x192xf32> to vector<2x192xf32>
    %113 = arith.addf %111, %112 : vector<2x192xf32>
    %114 = vector.extract_strided_slice %109 {offsets = [0, 0], sizes = [2, 128], strides = [1, 1]} : vector<2x192xf32> to vector<2x128xf32>
    %115 = vector.extract_strided_slice %113 {offsets = [0, 0], sizes = [2, 128], strides = [1, 1]} : vector<2x192xf32> to vector<2x128xf32>
    %116 = arith.addf %114, %115 : vector<2x128xf32>
    %117 = arith.negf %116 : vector<2x128xf32>
    %118 = math.exp %117 : vector<2x128xf32>
    %cst_23 = arith.constant 1.000000e+00 : f32
    %119 = vector.broadcast %cst_23 : f32 to vector<2x128xf32>
    %120 = arith.addf %119, %118 : vector<2x128xf32>
    %121 = arith.divf %119, %120 : vector<2x128xf32>
    %122 = vector.extract_strided_slice %121 {offsets = [0, 0], sizes = [2, 64], strides = [1, 1]} : vector<2x128xf32> to vector<2x64xf32>
    %123 = vector.extract_strided_slice %121 {offsets = [0, 64], sizes = [2, 64], strides = [1, 1]} : vector<2x128xf32> to vector<2x64xf32>
    %124 = vector.extract_strided_slice %109 {offsets = [0, 128], sizes = [2, 64], strides = [1, 1]} : vector<2x192xf32> to vector<2x64xf32>
    %125 = vector.extract_strided_slice %113 {offsets = [0, 128], sizes = [2, 64], strides = [1, 1]} : vector<2x192xf32> to vector<2x64xf32>
    %126 = arith.mulf %122, %125 : vector<2x64xf32>
    %127 = arith.addf %124, %126 : vector<2x64xf32>
    %128 = math.tanh %127 : vector<2x64xf32>
    %cst_24 = arith.constant 1.000000e+00 : f32
    %129 = vector.broadcast %cst_24 : f32 to vector<2x64xf32>
    %130 = arith.subf %129, %123 : vector<2x64xf32>
    %131 = arith.mulf %130, %128 : vector<2x64xf32>
    %132 = arith.mulf %123, %108 : vector<2x64xf32>
    %133 = arith.addf %131, %132 : vector<2x64xf32>
    %134 = vector.extract_strided_slice %5 {offsets = [10, 0], sizes = [2, 192], strides = [1, 1]} : vector<44x192xf32> to vector<2x192xf32>
    %135 = arith.truncf %133 : vector<2x64xf32> to vector<2x64xbf16>
    %cst_25 = arith.constant dense<0.000000e+00> : vector<2x192xf32>
    %136 = tpu.matmul %135, %6, %cst_25 {dimension_numbers = #tpu.dot_dimension_numbers<[1], [0], [0], [1], [0, 0, 1, 1], [], []>} : vector<2x64xbf16>, vector<64x192xbf16>, vector<2x192xf32> -> vector<2x192xf32>
    %137 = vector.broadcast %7 : vector<1x192xf32> to vector<2x192xf32>
    %138 = arith.addf %136, %137 : vector<2x192xf32>
    %139 = vector.extract_strided_slice %134 {offsets = [0, 0], sizes = [2, 128], strides = [1, 1]} : vector<2x192xf32> to vector<2x128xf32>
    %140 = vector.extract_strided_slice %138 {offsets = [0, 0], sizes = [2, 128], strides = [1, 1]} : vector<2x192xf32> to vector<2x128xf32>
    %141 = arith.addf %139, %140 : vector<2x128xf32>
    %142 = arith.negf %141 : vector<2x128xf32>
    %143 = math.exp %142 : vector<2x128xf32>
    %cst_26 = arith.constant 1.000000e+00 : f32
    %144 = vector.broadcast %cst_26 : f32 to vector<2x128xf32>
    %145 = arith.addf %144, %143 : vector<2x128xf32>
    %146 = arith.divf %144, %145 : vector<2x128xf32>
    %147 = vector.extract_strided_slice %146 {offsets = [0, 0], sizes = [2, 64], strides = [1, 1]} : vector<2x128xf32> to vector<2x64xf32>
    %148 = vector.extract_strided_slice %146 {offsets = [0, 64], sizes = [2, 64], strides = [1, 1]} : vector<2x128xf32> to vector<2x64xf32>
    %149 = vector.extract_strided_slice %134 {offsets = [0, 128], sizes = [2, 64], strides = [1, 1]} : vector<2x192xf32> to vector<2x64xf32>
    %150 = vector.extract_strided_slice %138 {offsets = [0, 128], sizes = [2, 64], strides = [1, 1]} : vector<2x192xf32> to vector<2x64xf32>
    %151 = arith.mulf %147, %150 : vector<2x64xf32>
    %152 = arith.addf %149, %151 : vector<2x64xf32>
    %153 = math.tanh %152 : vector<2x64xf32>
    %cst_27 = arith.constant 1.000000e+00 : f32
    %154 = vector.broadcast %cst_27 : f32 to vector<2x64xf32>
    %155 = arith.subf %154, %148 : vector<2x64xf32>
    %156 = arith.mulf %155, %153 : vector<2x64xf32>
    %157 = arith.mulf %148, %133 : vector<2x64xf32>
    %158 = arith.addf %156, %157 : vector<2x64xf32>
    %159 = vector.extract_strided_slice %5 {offsets = [12, 0], sizes = [2, 192], strides = [1, 1]} : vector<44x192xf32> to vector<2x192xf32>
    %160 = arith.truncf %158 : vector<2x64xf32> to vector<2x64xbf16>
    %cst_28 = arith.constant dense<0.000000e+00> : vector<2x192xf32>
    %161 = tpu.matmul %160, %6, %cst_28 {dimension_numbers = #tpu.dot_dimension_numbers<[1], [0], [0], [1], [0, 0, 1, 1], [], []>} : vector<2x64xbf16>, vector<64x192xbf16>, vector<2x192xf32> -> vector<2x192xf32>
    %162 = vector.broadcast %7 : vector<1x192xf32> to vector<2x192xf32>
    %163 = arith.addf %161, %162 : vector<2x192xf32>
    %164 = vector.extract_strided_slice %159 {offsets = [0, 0], sizes = [2, 128], strides = [1, 1]} : vector<2x192xf32> to vector<2x128xf32>
    %165 = vector.extract_strided_slice %163 {offsets = [0, 0], sizes = [2, 128], strides = [1, 1]} : vector<2x192xf32> to vector<2x128xf32>
    %166 = arith.addf %164, %165 : vector<2x128xf32>
    %167 = arith.negf %166 : vector<2x128xf32>
    %168 = math.exp %167 : vector<2x128xf32>
    %cst_29 = arith.constant 1.000000e+00 : f32
    %169 = vector.broadcast %cst_29 : f32 to vector<2x128xf32>
    %170 = arith.addf %169, %168 : vector<2x128xf32>
    %171 = arith.divf %169, %170 : vector<2x128xf32>
    %172 = vector.extract_strided_slice %171 {offsets = [0, 0], sizes = [2, 64], strides = [1, 1]} : vector<2x128xf32> to vector<2x64xf32>
    %173 = vector.extract_strided_slice %171 {offsets = [0, 64], sizes = [2, 64], strides = [1, 1]} : vector<2x128xf32> to vector<2x64xf32>
    %174 = vector.extract_strided_slice %159 {offsets = [0, 128], sizes = [2, 64], strides = [1, 1]} : vector<2x192xf32> to vector<2x64xf32>
    %175 = vector.extract_strided_slice %163 {offsets = [0, 128], sizes = [2, 64], strides = [1, 1]} : vector<2x192xf32> to vector<2x64xf32>
    %176 = arith.mulf %172, %175 : vector<2x64xf32>
    %177 = arith.addf %174, %176 : vector<2x64xf32>
    %178 = math.tanh %177 : vector<2x64xf32>
    %cst_30 = arith.constant 1.000000e+00 : f32
    %179 = vector.broadcast %cst_30 : f32 to vector<2x64xf32>
    %180 = arith.subf %179, %173 : vector<2x64xf32>
    %181 = arith.mulf %180, %178 : vector<2x64xf32>
    %182 = arith.mulf %173, %158 : vector<2x64xf32>
    %183 = arith.addf %181, %182 : vector<2x64xf32>
    %184 = vector.extract_strided_slice %5 {offsets = [14, 0], sizes = [2, 192], strides = [1, 1]} : vector<44x192xf32> to vector<2x192xf32>
    %185 = arith.truncf %183 : vector<2x64xf32> to vector<2x64xbf16>
    %cst_31 = arith.constant dense<0.000000e+00> : vector<2x192xf32>
    %186 = tpu.matmul %185, %6, %cst_31 {dimension_numbers = #tpu.dot_dimension_numbers<[1], [0], [0], [1], [0, 0, 1, 1], [], []>} : vector<2x64xbf16>, vector<64x192xbf16>, vector<2x192xf32> -> vector<2x192xf32>
    %187 = vector.broadcast %7 : vector<1x192xf32> to vector<2x192xf32>
    %188 = arith.addf %186, %187 : vector<2x192xf32>
    %189 = vector.extract_strided_slice %184 {offsets = [0, 0], sizes = [2, 128], strides = [1, 1]} : vector<2x192xf32> to vector<2x128xf32>
    %190 = vector.extract_strided_slice %188 {offsets = [0, 0], sizes = [2, 128], strides = [1, 1]} : vector<2x192xf32> to vector<2x128xf32>
    %191 = arith.addf %189, %190 : vector<2x128xf32>
    %192 = arith.negf %191 : vector<2x128xf32>
    %193 = math.exp %192 : vector<2x128xf32>
    %cst_32 = arith.constant 1.000000e+00 : f32
    %194 = vector.broadcast %cst_32 : f32 to vector<2x128xf32>
    %195 = arith.addf %194, %193 : vector<2x128xf32>
    %196 = arith.divf %194, %195 : vector<2x128xf32>
    %197 = vector.extract_strided_slice %196 {offsets = [0, 0], sizes = [2, 64], strides = [1, 1]} : vector<2x128xf32> to vector<2x64xf32>
    %198 = vector.extract_strided_slice %196 {offsets = [0, 64], sizes = [2, 64], strides = [1, 1]} : vector<2x128xf32> to vector<2x64xf32>
    %199 = vector.extract_strided_slice %184 {offsets = [0, 128], sizes = [2, 64], strides = [1, 1]} : vector<2x192xf32> to vector<2x64xf32>
    %200 = vector.extract_strided_slice %188 {offsets = [0, 128], sizes = [2, 64], strides = [1, 1]} : vector<2x192xf32> to vector<2x64xf32>
    %201 = arith.mulf %197, %200 : vector<2x64xf32>
    %202 = arith.addf %199, %201 : vector<2x64xf32>
    %203 = math.tanh %202 : vector<2x64xf32>
    %cst_33 = arith.constant 1.000000e+00 : f32
    %204 = vector.broadcast %cst_33 : f32 to vector<2x64xf32>
    %205 = arith.subf %204, %198 : vector<2x64xf32>
    %206 = arith.mulf %205, %203 : vector<2x64xf32>
    %207 = arith.mulf %198, %183 : vector<2x64xf32>
    %208 = arith.addf %206, %207 : vector<2x64xf32>
    %209 = vector.extract_strided_slice %5 {offsets = [16, 0], sizes = [2, 192], strides = [1, 1]} : vector<44x192xf32> to vector<2x192xf32>
    %210 = arith.truncf %208 : vector<2x64xf32> to vector<2x64xbf16>
    %cst_34 = arith.constant dense<0.000000e+00> : vector<2x192xf32>
    %211 = tpu.matmul %210, %6, %cst_34 {dimension_numbers = #tpu.dot_dimension_numbers<[1], [0], [0], [1], [0, 0, 1, 1], [], []>} : vector<2x64xbf16>, vector<64x192xbf16>, vector<2x192xf32> -> vector<2x192xf32>
    %212 = vector.broadcast %7 : vector<1x192xf32> to vector<2x192xf32>
    %213 = arith.addf %211, %212 : vector<2x192xf32>
    %214 = vector.extract_strided_slice %209 {offsets = [0, 0], sizes = [2, 128], strides = [1, 1]} : vector<2x192xf32> to vector<2x128xf32>
    %215 = vector.extract_strided_slice %213 {offsets = [0, 0], sizes = [2, 128], strides = [1, 1]} : vector<2x192xf32> to vector<2x128xf32>
    %216 = arith.addf %214, %215 : vector<2x128xf32>
    %217 = arith.negf %216 : vector<2x128xf32>
    %218 = math.exp %217 : vector<2x128xf32>
    %cst_35 = arith.constant 1.000000e+00 : f32
    %219 = vector.broadcast %cst_35 : f32 to vector<2x128xf32>
    %220 = arith.addf %219, %218 : vector<2x128xf32>
    %221 = arith.divf %219, %220 : vector<2x128xf32>
    %222 = vector.extract_strided_slice %221 {offsets = [0, 0], sizes = [2, 64], strides = [1, 1]} : vector<2x128xf32> to vector<2x64xf32>
    %223 = vector.extract_strided_slice %221 {offsets = [0, 64], sizes = [2, 64], strides = [1, 1]} : vector<2x128xf32> to vector<2x64xf32>
    %224 = vector.extract_strided_slice %209 {offsets = [0, 128], sizes = [2, 64], strides = [1, 1]} : vector<2x192xf32> to vector<2x64xf32>
    %225 = vector.extract_strided_slice %213 {offsets = [0, 128], sizes = [2, 64], strides = [1, 1]} : vector<2x192xf32> to vector<2x64xf32>
    %226 = arith.mulf %222, %225 : vector<2x64xf32>
    %227 = arith.addf %224, %226 : vector<2x64xf32>
    %228 = math.tanh %227 : vector<2x64xf32>
    %cst_36 = arith.constant 1.000000e+00 : f32
    %229 = vector.broadcast %cst_36 : f32 to vector<2x64xf32>
    %230 = arith.subf %229, %223 : vector<2x64xf32>
    %231 = arith.mulf %230, %228 : vector<2x64xf32>
    %232 = arith.mulf %223, %208 : vector<2x64xf32>
    %233 = arith.addf %231, %232 : vector<2x64xf32>
    %234 = vector.extract_strided_slice %5 {offsets = [18, 0], sizes = [2, 192], strides = [1, 1]} : vector<44x192xf32> to vector<2x192xf32>
    %235 = arith.truncf %233 : vector<2x64xf32> to vector<2x64xbf16>
    %cst_37 = arith.constant dense<0.000000e+00> : vector<2x192xf32>
    %236 = tpu.matmul %235, %6, %cst_37 {dimension_numbers = #tpu.dot_dimension_numbers<[1], [0], [0], [1], [0, 0, 1, 1], [], []>} : vector<2x64xbf16>, vector<64x192xbf16>, vector<2x192xf32> -> vector<2x192xf32>
    %237 = vector.broadcast %7 : vector<1x192xf32> to vector<2x192xf32>
    %238 = arith.addf %236, %237 : vector<2x192xf32>
    %239 = vector.extract_strided_slice %234 {offsets = [0, 0], sizes = [2, 128], strides = [1, 1]} : vector<2x192xf32> to vector<2x128xf32>
    %240 = vector.extract_strided_slice %238 {offsets = [0, 0], sizes = [2, 128], strides = [1, 1]} : vector<2x192xf32> to vector<2x128xf32>
    %241 = arith.addf %239, %240 : vector<2x128xf32>
    %242 = arith.negf %241 : vector<2x128xf32>
    %243 = math.exp %242 : vector<2x128xf32>
    %cst_38 = arith.constant 1.000000e+00 : f32
    %244 = vector.broadcast %cst_38 : f32 to vector<2x128xf32>
    %245 = arith.addf %244, %243 : vector<2x128xf32>
    %246 = arith.divf %244, %245 : vector<2x128xf32>
    %247 = vector.extract_strided_slice %246 {offsets = [0, 0], sizes = [2, 64], strides = [1, 1]} : vector<2x128xf32> to vector<2x64xf32>
    %248 = vector.extract_strided_slice %246 {offsets = [0, 64], sizes = [2, 64], strides = [1, 1]} : vector<2x128xf32> to vector<2x64xf32>
    %249 = vector.extract_strided_slice %234 {offsets = [0, 128], sizes = [2, 64], strides = [1, 1]} : vector<2x192xf32> to vector<2x64xf32>
    %250 = vector.extract_strided_slice %238 {offsets = [0, 128], sizes = [2, 64], strides = [1, 1]} : vector<2x192xf32> to vector<2x64xf32>
    %251 = arith.mulf %247, %250 : vector<2x64xf32>
    %252 = arith.addf %249, %251 : vector<2x64xf32>
    %253 = math.tanh %252 : vector<2x64xf32>
    %cst_39 = arith.constant 1.000000e+00 : f32
    %254 = vector.broadcast %cst_39 : f32 to vector<2x64xf32>
    %255 = arith.subf %254, %248 : vector<2x64xf32>
    %256 = arith.mulf %255, %253 : vector<2x64xf32>
    %257 = arith.mulf %248, %233 : vector<2x64xf32>
    %258 = arith.addf %256, %257 : vector<2x64xf32>
    %259 = vector.extract_strided_slice %5 {offsets = [20, 0], sizes = [2, 192], strides = [1, 1]} : vector<44x192xf32> to vector<2x192xf32>
    %260 = arith.truncf %258 : vector<2x64xf32> to vector<2x64xbf16>
    %cst_40 = arith.constant dense<0.000000e+00> : vector<2x192xf32>
    %261 = tpu.matmul %260, %6, %cst_40 {dimension_numbers = #tpu.dot_dimension_numbers<[1], [0], [0], [1], [0, 0, 1, 1], [], []>} : vector<2x64xbf16>, vector<64x192xbf16>, vector<2x192xf32> -> vector<2x192xf32>
    %262 = vector.broadcast %7 : vector<1x192xf32> to vector<2x192xf32>
    %263 = arith.addf %261, %262 : vector<2x192xf32>
    %264 = vector.extract_strided_slice %259 {offsets = [0, 0], sizes = [2, 128], strides = [1, 1]} : vector<2x192xf32> to vector<2x128xf32>
    %265 = vector.extract_strided_slice %263 {offsets = [0, 0], sizes = [2, 128], strides = [1, 1]} : vector<2x192xf32> to vector<2x128xf32>
    %266 = arith.addf %264, %265 : vector<2x128xf32>
    %267 = arith.negf %266 : vector<2x128xf32>
    %268 = math.exp %267 : vector<2x128xf32>
    %cst_41 = arith.constant 1.000000e+00 : f32
    %269 = vector.broadcast %cst_41 : f32 to vector<2x128xf32>
    %270 = arith.addf %269, %268 : vector<2x128xf32>
    %271 = arith.divf %269, %270 : vector<2x128xf32>
    %272 = vector.extract_strided_slice %271 {offsets = [0, 0], sizes = [2, 64], strides = [1, 1]} : vector<2x128xf32> to vector<2x64xf32>
    %273 = vector.extract_strided_slice %271 {offsets = [0, 64], sizes = [2, 64], strides = [1, 1]} : vector<2x128xf32> to vector<2x64xf32>
    %274 = vector.extract_strided_slice %259 {offsets = [0, 128], sizes = [2, 64], strides = [1, 1]} : vector<2x192xf32> to vector<2x64xf32>
    %275 = vector.extract_strided_slice %263 {offsets = [0, 128], sizes = [2, 64], strides = [1, 1]} : vector<2x192xf32> to vector<2x64xf32>
    %276 = arith.mulf %272, %275 : vector<2x64xf32>
    %277 = arith.addf %274, %276 : vector<2x64xf32>
    %278 = math.tanh %277 : vector<2x64xf32>
    %cst_42 = arith.constant 1.000000e+00 : f32
    %279 = vector.broadcast %cst_42 : f32 to vector<2x64xf32>
    %280 = arith.subf %279, %273 : vector<2x64xf32>
    %281 = arith.mulf %280, %278 : vector<2x64xf32>
    %282 = arith.mulf %273, %258 : vector<2x64xf32>
    %283 = arith.addf %281, %282 : vector<2x64xf32>
    %284 = vector.extract_strided_slice %5 {offsets = [22, 0], sizes = [2, 192], strides = [1, 1]} : vector<44x192xf32> to vector<2x192xf32>
    %285 = arith.truncf %283 : vector<2x64xf32> to vector<2x64xbf16>
    %cst_43 = arith.constant dense<0.000000e+00> : vector<2x192xf32>
    %286 = tpu.matmul %285, %6, %cst_43 {dimension_numbers = #tpu.dot_dimension_numbers<[1], [0], [0], [1], [0, 0, 1, 1], [], []>} : vector<2x64xbf16>, vector<64x192xbf16>, vector<2x192xf32> -> vector<2x192xf32>
    %287 = vector.broadcast %7 : vector<1x192xf32> to vector<2x192xf32>
    %288 = arith.addf %286, %287 : vector<2x192xf32>
    %289 = vector.extract_strided_slice %284 {offsets = [0, 0], sizes = [2, 128], strides = [1, 1]} : vector<2x192xf32> to vector<2x128xf32>
    %290 = vector.extract_strided_slice %288 {offsets = [0, 0], sizes = [2, 128], strides = [1, 1]} : vector<2x192xf32> to vector<2x128xf32>
    %291 = arith.addf %289, %290 : vector<2x128xf32>
    %292 = arith.negf %291 : vector<2x128xf32>
    %293 = math.exp %292 : vector<2x128xf32>
    %cst_44 = arith.constant 1.000000e+00 : f32
    %294 = vector.broadcast %cst_44 : f32 to vector<2x128xf32>
    %295 = arith.addf %294, %293 : vector<2x128xf32>
    %296 = arith.divf %294, %295 : vector<2x128xf32>
    %297 = vector.extract_strided_slice %296 {offsets = [0, 0], sizes = [2, 64], strides = [1, 1]} : vector<2x128xf32> to vector<2x64xf32>
    %298 = vector.extract_strided_slice %296 {offsets = [0, 64], sizes = [2, 64], strides = [1, 1]} : vector<2x128xf32> to vector<2x64xf32>
    %299 = vector.extract_strided_slice %284 {offsets = [0, 128], sizes = [2, 64], strides = [1, 1]} : vector<2x192xf32> to vector<2x64xf32>
    %300 = vector.extract_strided_slice %288 {offsets = [0, 128], sizes = [2, 64], strides = [1, 1]} : vector<2x192xf32> to vector<2x64xf32>
    %301 = arith.mulf %297, %300 : vector<2x64xf32>
    %302 = arith.addf %299, %301 : vector<2x64xf32>
    %303 = math.tanh %302 : vector<2x64xf32>
    %cst_45 = arith.constant 1.000000e+00 : f32
    %304 = vector.broadcast %cst_45 : f32 to vector<2x64xf32>
    %305 = arith.subf %304, %298 : vector<2x64xf32>
    %306 = arith.mulf %305, %303 : vector<2x64xf32>
    %307 = arith.mulf %298, %283 : vector<2x64xf32>
    %308 = arith.addf %306, %307 : vector<2x64xf32>
    %309 = vector.extract_strided_slice %5 {offsets = [24, 0], sizes = [2, 192], strides = [1, 1]} : vector<44x192xf32> to vector<2x192xf32>
    %310 = arith.truncf %308 : vector<2x64xf32> to vector<2x64xbf16>
    %cst_46 = arith.constant dense<0.000000e+00> : vector<2x192xf32>
    %311 = tpu.matmul %310, %6, %cst_46 {dimension_numbers = #tpu.dot_dimension_numbers<[1], [0], [0], [1], [0, 0, 1, 1], [], []>} : vector<2x64xbf16>, vector<64x192xbf16>, vector<2x192xf32> -> vector<2x192xf32>
    %312 = vector.broadcast %7 : vector<1x192xf32> to vector<2x192xf32>
    %313 = arith.addf %311, %312 : vector<2x192xf32>
    %314 = vector.extract_strided_slice %309 {offsets = [0, 0], sizes = [2, 128], strides = [1, 1]} : vector<2x192xf32> to vector<2x128xf32>
    %315 = vector.extract_strided_slice %313 {offsets = [0, 0], sizes = [2, 128], strides = [1, 1]} : vector<2x192xf32> to vector<2x128xf32>
    %316 = arith.addf %314, %315 : vector<2x128xf32>
    %317 = arith.negf %316 : vector<2x128xf32>
    %318 = math.exp %317 : vector<2x128xf32>
    %cst_47 = arith.constant 1.000000e+00 : f32
    %319 = vector.broadcast %cst_47 : f32 to vector<2x128xf32>
    %320 = arith.addf %319, %318 : vector<2x128xf32>
    %321 = arith.divf %319, %320 : vector<2x128xf32>
    %322 = vector.extract_strided_slice %321 {offsets = [0, 0], sizes = [2, 64], strides = [1, 1]} : vector<2x128xf32> to vector<2x64xf32>
    %323 = vector.extract_strided_slice %321 {offsets = [0, 64], sizes = [2, 64], strides = [1, 1]} : vector<2x128xf32> to vector<2x64xf32>
    %324 = vector.extract_strided_slice %309 {offsets = [0, 128], sizes = [2, 64], strides = [1, 1]} : vector<2x192xf32> to vector<2x64xf32>
    %325 = vector.extract_strided_slice %313 {offsets = [0, 128], sizes = [2, 64], strides = [1, 1]} : vector<2x192xf32> to vector<2x64xf32>
    %326 = arith.mulf %322, %325 : vector<2x64xf32>
    %327 = arith.addf %324, %326 : vector<2x64xf32>
    %328 = math.tanh %327 : vector<2x64xf32>
    %cst_48 = arith.constant 1.000000e+00 : f32
    %329 = vector.broadcast %cst_48 : f32 to vector<2x64xf32>
    %330 = arith.subf %329, %323 : vector<2x64xf32>
    %331 = arith.mulf %330, %328 : vector<2x64xf32>
    %332 = arith.mulf %323, %308 : vector<2x64xf32>
    %333 = arith.addf %331, %332 : vector<2x64xf32>
    %334 = vector.extract_strided_slice %5 {offsets = [26, 0], sizes = [2, 192], strides = [1, 1]} : vector<44x192xf32> to vector<2x192xf32>
    %335 = arith.truncf %333 : vector<2x64xf32> to vector<2x64xbf16>
    %cst_49 = arith.constant dense<0.000000e+00> : vector<2x192xf32>
    %336 = tpu.matmul %335, %6, %cst_49 {dimension_numbers = #tpu.dot_dimension_numbers<[1], [0], [0], [1], [0, 0, 1, 1], [], []>} : vector<2x64xbf16>, vector<64x192xbf16>, vector<2x192xf32> -> vector<2x192xf32>
    %337 = vector.broadcast %7 : vector<1x192xf32> to vector<2x192xf32>
    %338 = arith.addf %336, %337 : vector<2x192xf32>
    %339 = vector.extract_strided_slice %334 {offsets = [0, 0], sizes = [2, 128], strides = [1, 1]} : vector<2x192xf32> to vector<2x128xf32>
    %340 = vector.extract_strided_slice %338 {offsets = [0, 0], sizes = [2, 128], strides = [1, 1]} : vector<2x192xf32> to vector<2x128xf32>
    %341 = arith.addf %339, %340 : vector<2x128xf32>
    %342 = arith.negf %341 : vector<2x128xf32>
    %343 = math.exp %342 : vector<2x128xf32>
    %cst_50 = arith.constant 1.000000e+00 : f32
    %344 = vector.broadcast %cst_50 : f32 to vector<2x128xf32>
    %345 = arith.addf %344, %343 : vector<2x128xf32>
    %346 = arith.divf %344, %345 : vector<2x128xf32>
    %347 = vector.extract_strided_slice %346 {offsets = [0, 0], sizes = [2, 64], strides = [1, 1]} : vector<2x128xf32> to vector<2x64xf32>
    %348 = vector.extract_strided_slice %346 {offsets = [0, 64], sizes = [2, 64], strides = [1, 1]} : vector<2x128xf32> to vector<2x64xf32>
    %349 = vector.extract_strided_slice %334 {offsets = [0, 128], sizes = [2, 64], strides = [1, 1]} : vector<2x192xf32> to vector<2x64xf32>
    %350 = vector.extract_strided_slice %338 {offsets = [0, 128], sizes = [2, 64], strides = [1, 1]} : vector<2x192xf32> to vector<2x64xf32>
    %351 = arith.mulf %347, %350 : vector<2x64xf32>
    %352 = arith.addf %349, %351 : vector<2x64xf32>
    %353 = math.tanh %352 : vector<2x64xf32>
    %cst_51 = arith.constant 1.000000e+00 : f32
    %354 = vector.broadcast %cst_51 : f32 to vector<2x64xf32>
    %355 = arith.subf %354, %348 : vector<2x64xf32>
    %356 = arith.mulf %355, %353 : vector<2x64xf32>
    %357 = arith.mulf %348, %333 : vector<2x64xf32>
    %358 = arith.addf %356, %357 : vector<2x64xf32>
    %359 = vector.extract_strided_slice %5 {offsets = [28, 0], sizes = [2, 192], strides = [1, 1]} : vector<44x192xf32> to vector<2x192xf32>
    %360 = arith.truncf %358 : vector<2x64xf32> to vector<2x64xbf16>
    %cst_52 = arith.constant dense<0.000000e+00> : vector<2x192xf32>
    %361 = tpu.matmul %360, %6, %cst_52 {dimension_numbers = #tpu.dot_dimension_numbers<[1], [0], [0], [1], [0, 0, 1, 1], [], []>} : vector<2x64xbf16>, vector<64x192xbf16>, vector<2x192xf32> -> vector<2x192xf32>
    %362 = vector.broadcast %7 : vector<1x192xf32> to vector<2x192xf32>
    %363 = arith.addf %361, %362 : vector<2x192xf32>
    %364 = vector.extract_strided_slice %359 {offsets = [0, 0], sizes = [2, 128], strides = [1, 1]} : vector<2x192xf32> to vector<2x128xf32>
    %365 = vector.extract_strided_slice %363 {offsets = [0, 0], sizes = [2, 128], strides = [1, 1]} : vector<2x192xf32> to vector<2x128xf32>
    %366 = arith.addf %364, %365 : vector<2x128xf32>
    %367 = arith.negf %366 : vector<2x128xf32>
    %368 = math.exp %367 : vector<2x128xf32>
    %cst_53 = arith.constant 1.000000e+00 : f32
    %369 = vector.broadcast %cst_53 : f32 to vector<2x128xf32>
    %370 = arith.addf %369, %368 : vector<2x128xf32>
    %371 = arith.divf %369, %370 : vector<2x128xf32>
    %372 = vector.extract_strided_slice %371 {offsets = [0, 0], sizes = [2, 64], strides = [1, 1]} : vector<2x128xf32> to vector<2x64xf32>
    %373 = vector.extract_strided_slice %371 {offsets = [0, 64], sizes = [2, 64], strides = [1, 1]} : vector<2x128xf32> to vector<2x64xf32>
    %374 = vector.extract_strided_slice %359 {offsets = [0, 128], sizes = [2, 64], strides = [1, 1]} : vector<2x192xf32> to vector<2x64xf32>
    %375 = vector.extract_strided_slice %363 {offsets = [0, 128], sizes = [2, 64], strides = [1, 1]} : vector<2x192xf32> to vector<2x64xf32>
    %376 = arith.mulf %372, %375 : vector<2x64xf32>
    %377 = arith.addf %374, %376 : vector<2x64xf32>
    %378 = math.tanh %377 : vector<2x64xf32>
    %cst_54 = arith.constant 1.000000e+00 : f32
    %379 = vector.broadcast %cst_54 : f32 to vector<2x64xf32>
    %380 = arith.subf %379, %373 : vector<2x64xf32>
    %381 = arith.mulf %380, %378 : vector<2x64xf32>
    %382 = arith.mulf %373, %358 : vector<2x64xf32>
    %383 = arith.addf %381, %382 : vector<2x64xf32>
    %384 = vector.extract_strided_slice %5 {offsets = [30, 0], sizes = [2, 192], strides = [1, 1]} : vector<44x192xf32> to vector<2x192xf32>
    %385 = arith.truncf %383 : vector<2x64xf32> to vector<2x64xbf16>
    %cst_55 = arith.constant dense<0.000000e+00> : vector<2x192xf32>
    %386 = tpu.matmul %385, %6, %cst_55 {dimension_numbers = #tpu.dot_dimension_numbers<[1], [0], [0], [1], [0, 0, 1, 1], [], []>} : vector<2x64xbf16>, vector<64x192xbf16>, vector<2x192xf32> -> vector<2x192xf32>
    %387 = vector.broadcast %7 : vector<1x192xf32> to vector<2x192xf32>
    %388 = arith.addf %386, %387 : vector<2x192xf32>
    %389 = vector.extract_strided_slice %384 {offsets = [0, 0], sizes = [2, 128], strides = [1, 1]} : vector<2x192xf32> to vector<2x128xf32>
    %390 = vector.extract_strided_slice %388 {offsets = [0, 0], sizes = [2, 128], strides = [1, 1]} : vector<2x192xf32> to vector<2x128xf32>
    %391 = arith.addf %389, %390 : vector<2x128xf32>
    %392 = arith.negf %391 : vector<2x128xf32>
    %393 = math.exp %392 : vector<2x128xf32>
    %cst_56 = arith.constant 1.000000e+00 : f32
    %394 = vector.broadcast %cst_56 : f32 to vector<2x128xf32>
    %395 = arith.addf %394, %393 : vector<2x128xf32>
    %396 = arith.divf %394, %395 : vector<2x128xf32>
    %397 = vector.extract_strided_slice %396 {offsets = [0, 0], sizes = [2, 64], strides = [1, 1]} : vector<2x128xf32> to vector<2x64xf32>
    %398 = vector.extract_strided_slice %396 {offsets = [0, 64], sizes = [2, 64], strides = [1, 1]} : vector<2x128xf32> to vector<2x64xf32>
    %399 = vector.extract_strided_slice %384 {offsets = [0, 128], sizes = [2, 64], strides = [1, 1]} : vector<2x192xf32> to vector<2x64xf32>
    %400 = vector.extract_strided_slice %388 {offsets = [0, 128], sizes = [2, 64], strides = [1, 1]} : vector<2x192xf32> to vector<2x64xf32>
    %401 = arith.mulf %397, %400 : vector<2x64xf32>
    %402 = arith.addf %399, %401 : vector<2x64xf32>
    %403 = math.tanh %402 : vector<2x64xf32>
    %cst_57 = arith.constant 1.000000e+00 : f32
    %404 = vector.broadcast %cst_57 : f32 to vector<2x64xf32>
    %405 = arith.subf %404, %398 : vector<2x64xf32>
    %406 = arith.mulf %405, %403 : vector<2x64xf32>
    %407 = arith.mulf %398, %383 : vector<2x64xf32>
    %408 = arith.addf %406, %407 : vector<2x64xf32>
    %409 = vector.extract_strided_slice %5 {offsets = [32, 0], sizes = [2, 192], strides = [1, 1]} : vector<44x192xf32> to vector<2x192xf32>
    %410 = arith.truncf %408 : vector<2x64xf32> to vector<2x64xbf16>
    %cst_58 = arith.constant dense<0.000000e+00> : vector<2x192xf32>
    %411 = tpu.matmul %410, %6, %cst_58 {dimension_numbers = #tpu.dot_dimension_numbers<[1], [0], [0], [1], [0, 0, 1, 1], [], []>} : vector<2x64xbf16>, vector<64x192xbf16>, vector<2x192xf32> -> vector<2x192xf32>
    %412 = vector.broadcast %7 : vector<1x192xf32> to vector<2x192xf32>
    %413 = arith.addf %411, %412 : vector<2x192xf32>
    %414 = vector.extract_strided_slice %409 {offsets = [0, 0], sizes = [2, 128], strides = [1, 1]} : vector<2x192xf32> to vector<2x128xf32>
    %415 = vector.extract_strided_slice %413 {offsets = [0, 0], sizes = [2, 128], strides = [1, 1]} : vector<2x192xf32> to vector<2x128xf32>
    %416 = arith.addf %414, %415 : vector<2x128xf32>
    %417 = arith.negf %416 : vector<2x128xf32>
    %418 = math.exp %417 : vector<2x128xf32>
    %cst_59 = arith.constant 1.000000e+00 : f32
    %419 = vector.broadcast %cst_59 : f32 to vector<2x128xf32>
    %420 = arith.addf %419, %418 : vector<2x128xf32>
    %421 = arith.divf %419, %420 : vector<2x128xf32>
    %422 = vector.extract_strided_slice %421 {offsets = [0, 0], sizes = [2, 64], strides = [1, 1]} : vector<2x128xf32> to vector<2x64xf32>
    %423 = vector.extract_strided_slice %421 {offsets = [0, 64], sizes = [2, 64], strides = [1, 1]} : vector<2x128xf32> to vector<2x64xf32>
    %424 = vector.extract_strided_slice %409 {offsets = [0, 128], sizes = [2, 64], strides = [1, 1]} : vector<2x192xf32> to vector<2x64xf32>
    %425 = vector.extract_strided_slice %413 {offsets = [0, 128], sizes = [2, 64], strides = [1, 1]} : vector<2x192xf32> to vector<2x64xf32>
    %426 = arith.mulf %422, %425 : vector<2x64xf32>
    %427 = arith.addf %424, %426 : vector<2x64xf32>
    %428 = math.tanh %427 : vector<2x64xf32>
    %cst_60 = arith.constant 1.000000e+00 : f32
    %429 = vector.broadcast %cst_60 : f32 to vector<2x64xf32>
    %430 = arith.subf %429, %423 : vector<2x64xf32>
    %431 = arith.mulf %430, %428 : vector<2x64xf32>
    %432 = arith.mulf %423, %408 : vector<2x64xf32>
    %433 = arith.addf %431, %432 : vector<2x64xf32>
    %434 = vector.extract_strided_slice %5 {offsets = [34, 0], sizes = [2, 192], strides = [1, 1]} : vector<44x192xf32> to vector<2x192xf32>
    %435 = arith.truncf %433 : vector<2x64xf32> to vector<2x64xbf16>
    %cst_61 = arith.constant dense<0.000000e+00> : vector<2x192xf32>
    %436 = tpu.matmul %435, %6, %cst_61 {dimension_numbers = #tpu.dot_dimension_numbers<[1], [0], [0], [1], [0, 0, 1, 1], [], []>} : vector<2x64xbf16>, vector<64x192xbf16>, vector<2x192xf32> -> vector<2x192xf32>
    %437 = vector.broadcast %7 : vector<1x192xf32> to vector<2x192xf32>
    %438 = arith.addf %436, %437 : vector<2x192xf32>
    %439 = vector.extract_strided_slice %434 {offsets = [0, 0], sizes = [2, 128], strides = [1, 1]} : vector<2x192xf32> to vector<2x128xf32>
    %440 = vector.extract_strided_slice %438 {offsets = [0, 0], sizes = [2, 128], strides = [1, 1]} : vector<2x192xf32> to vector<2x128xf32>
    %441 = arith.addf %439, %440 : vector<2x128xf32>
    %442 = arith.negf %441 : vector<2x128xf32>
    %443 = math.exp %442 : vector<2x128xf32>
    %cst_62 = arith.constant 1.000000e+00 : f32
    %444 = vector.broadcast %cst_62 : f32 to vector<2x128xf32>
    %445 = arith.addf %444, %443 : vector<2x128xf32>
    %446 = arith.divf %444, %445 : vector<2x128xf32>
    %447 = vector.extract_strided_slice %446 {offsets = [0, 0], sizes = [2, 64], strides = [1, 1]} : vector<2x128xf32> to vector<2x64xf32>
    %448 = vector.extract_strided_slice %446 {offsets = [0, 64], sizes = [2, 64], strides = [1, 1]} : vector<2x128xf32> to vector<2x64xf32>
    %449 = vector.extract_strided_slice %434 {offsets = [0, 128], sizes = [2, 64], strides = [1, 1]} : vector<2x192xf32> to vector<2x64xf32>
    %450 = vector.extract_strided_slice %438 {offsets = [0, 128], sizes = [2, 64], strides = [1, 1]} : vector<2x192xf32> to vector<2x64xf32>
    %451 = arith.mulf %447, %450 : vector<2x64xf32>
    %452 = arith.addf %449, %451 : vector<2x64xf32>
    %453 = math.tanh %452 : vector<2x64xf32>
    %cst_63 = arith.constant 1.000000e+00 : f32
    %454 = vector.broadcast %cst_63 : f32 to vector<2x64xf32>
    %455 = arith.subf %454, %448 : vector<2x64xf32>
    %456 = arith.mulf %455, %453 : vector<2x64xf32>
    %457 = arith.mulf %448, %433 : vector<2x64xf32>
    %458 = arith.addf %456, %457 : vector<2x64xf32>
    %459 = vector.extract_strided_slice %5 {offsets = [36, 0], sizes = [2, 192], strides = [1, 1]} : vector<44x192xf32> to vector<2x192xf32>
    %460 = arith.truncf %458 : vector<2x64xf32> to vector<2x64xbf16>
    %cst_64 = arith.constant dense<0.000000e+00> : vector<2x192xf32>
    %461 = tpu.matmul %460, %6, %cst_64 {dimension_numbers = #tpu.dot_dimension_numbers<[1], [0], [0], [1], [0, 0, 1, 1], [], []>} : vector<2x64xbf16>, vector<64x192xbf16>, vector<2x192xf32> -> vector<2x192xf32>
    %462 = vector.broadcast %7 : vector<1x192xf32> to vector<2x192xf32>
    %463 = arith.addf %461, %462 : vector<2x192xf32>
    %464 = vector.extract_strided_slice %459 {offsets = [0, 0], sizes = [2, 128], strides = [1, 1]} : vector<2x192xf32> to vector<2x128xf32>
    %465 = vector.extract_strided_slice %463 {offsets = [0, 0], sizes = [2, 128], strides = [1, 1]} : vector<2x192xf32> to vector<2x128xf32>
    %466 = arith.addf %464, %465 : vector<2x128xf32>
    %467 = arith.negf %466 : vector<2x128xf32>
    %468 = math.exp %467 : vector<2x128xf32>
    %cst_65 = arith.constant 1.000000e+00 : f32
    %469 = vector.broadcast %cst_65 : f32 to vector<2x128xf32>
    %470 = arith.addf %469, %468 : vector<2x128xf32>
    %471 = arith.divf %469, %470 : vector<2x128xf32>
    %472 = vector.extract_strided_slice %471 {offsets = [0, 0], sizes = [2, 64], strides = [1, 1]} : vector<2x128xf32> to vector<2x64xf32>
    %473 = vector.extract_strided_slice %471 {offsets = [0, 64], sizes = [2, 64], strides = [1, 1]} : vector<2x128xf32> to vector<2x64xf32>
    %474 = vector.extract_strided_slice %459 {offsets = [0, 128], sizes = [2, 64], strides = [1, 1]} : vector<2x192xf32> to vector<2x64xf32>
    %475 = vector.extract_strided_slice %463 {offsets = [0, 128], sizes = [2, 64], strides = [1, 1]} : vector<2x192xf32> to vector<2x64xf32>
    %476 = arith.mulf %472, %475 : vector<2x64xf32>
    %477 = arith.addf %474, %476 : vector<2x64xf32>
    %478 = math.tanh %477 : vector<2x64xf32>
    %cst_66 = arith.constant 1.000000e+00 : f32
    %479 = vector.broadcast %cst_66 : f32 to vector<2x64xf32>
    %480 = arith.subf %479, %473 : vector<2x64xf32>
    %481 = arith.mulf %480, %478 : vector<2x64xf32>
    %482 = arith.mulf %473, %458 : vector<2x64xf32>
    %483 = arith.addf %481, %482 : vector<2x64xf32>
    %484 = vector.extract_strided_slice %5 {offsets = [38, 0], sizes = [2, 192], strides = [1, 1]} : vector<44x192xf32> to vector<2x192xf32>
    %485 = arith.truncf %483 : vector<2x64xf32> to vector<2x64xbf16>
    %cst_67 = arith.constant dense<0.000000e+00> : vector<2x192xf32>
    %486 = tpu.matmul %485, %6, %cst_67 {dimension_numbers = #tpu.dot_dimension_numbers<[1], [0], [0], [1], [0, 0, 1, 1], [], []>} : vector<2x64xbf16>, vector<64x192xbf16>, vector<2x192xf32> -> vector<2x192xf32>
    %487 = vector.broadcast %7 : vector<1x192xf32> to vector<2x192xf32>
    %488 = arith.addf %486, %487 : vector<2x192xf32>
    %489 = vector.extract_strided_slice %484 {offsets = [0, 0], sizes = [2, 128], strides = [1, 1]} : vector<2x192xf32> to vector<2x128xf32>
    %490 = vector.extract_strided_slice %488 {offsets = [0, 0], sizes = [2, 128], strides = [1, 1]} : vector<2x192xf32> to vector<2x128xf32>
    %491 = arith.addf %489, %490 : vector<2x128xf32>
    %492 = arith.negf %491 : vector<2x128xf32>
    %493 = math.exp %492 : vector<2x128xf32>
    %cst_68 = arith.constant 1.000000e+00 : f32
    %494 = vector.broadcast %cst_68 : f32 to vector<2x128xf32>
    %495 = arith.addf %494, %493 : vector<2x128xf32>
    %496 = arith.divf %494, %495 : vector<2x128xf32>
    %497 = vector.extract_strided_slice %496 {offsets = [0, 0], sizes = [2, 64], strides = [1, 1]} : vector<2x128xf32> to vector<2x64xf32>
    %498 = vector.extract_strided_slice %496 {offsets = [0, 64], sizes = [2, 64], strides = [1, 1]} : vector<2x128xf32> to vector<2x64xf32>
    %499 = vector.extract_strided_slice %484 {offsets = [0, 128], sizes = [2, 64], strides = [1, 1]} : vector<2x192xf32> to vector<2x64xf32>
    %500 = vector.extract_strided_slice %488 {offsets = [0, 128], sizes = [2, 64], strides = [1, 1]} : vector<2x192xf32> to vector<2x64xf32>
    %501 = arith.mulf %497, %500 : vector<2x64xf32>
    %502 = arith.addf %499, %501 : vector<2x64xf32>
    %503 = math.tanh %502 : vector<2x64xf32>
    %cst_69 = arith.constant 1.000000e+00 : f32
    %504 = vector.broadcast %cst_69 : f32 to vector<2x64xf32>
    %505 = arith.subf %504, %498 : vector<2x64xf32>
    %506 = arith.mulf %505, %503 : vector<2x64xf32>
    %507 = arith.mulf %498, %483 : vector<2x64xf32>
    %508 = arith.addf %506, %507 : vector<2x64xf32>
    %509 = vector.extract_strided_slice %5 {offsets = [40, 0], sizes = [2, 192], strides = [1, 1]} : vector<44x192xf32> to vector<2x192xf32>
    %510 = arith.truncf %508 : vector<2x64xf32> to vector<2x64xbf16>
    %cst_70 = arith.constant dense<0.000000e+00> : vector<2x192xf32>
    %511 = tpu.matmul %510, %6, %cst_70 {dimension_numbers = #tpu.dot_dimension_numbers<[1], [0], [0], [1], [0, 0, 1, 1], [], []>} : vector<2x64xbf16>, vector<64x192xbf16>, vector<2x192xf32> -> vector<2x192xf32>
    %512 = vector.broadcast %7 : vector<1x192xf32> to vector<2x192xf32>
    %513 = arith.addf %511, %512 : vector<2x192xf32>
    %514 = vector.extract_strided_slice %509 {offsets = [0, 0], sizes = [2, 128], strides = [1, 1]} : vector<2x192xf32> to vector<2x128xf32>
    %515 = vector.extract_strided_slice %513 {offsets = [0, 0], sizes = [2, 128], strides = [1, 1]} : vector<2x192xf32> to vector<2x128xf32>
    %516 = arith.addf %514, %515 : vector<2x128xf32>
    %517 = arith.negf %516 : vector<2x128xf32>
    %518 = math.exp %517 : vector<2x128xf32>
    %cst_71 = arith.constant 1.000000e+00 : f32
    %519 = vector.broadcast %cst_71 : f32 to vector<2x128xf32>
    %520 = arith.addf %519, %518 : vector<2x128xf32>
    %521 = arith.divf %519, %520 : vector<2x128xf32>
    %522 = vector.extract_strided_slice %521 {offsets = [0, 0], sizes = [2, 64], strides = [1, 1]} : vector<2x128xf32> to vector<2x64xf32>
    %523 = vector.extract_strided_slice %521 {offsets = [0, 64], sizes = [2, 64], strides = [1, 1]} : vector<2x128xf32> to vector<2x64xf32>
    %524 = vector.extract_strided_slice %509 {offsets = [0, 128], sizes = [2, 64], strides = [1, 1]} : vector<2x192xf32> to vector<2x64xf32>
    %525 = vector.extract_strided_slice %513 {offsets = [0, 128], sizes = [2, 64], strides = [1, 1]} : vector<2x192xf32> to vector<2x64xf32>
    %526 = arith.mulf %522, %525 : vector<2x64xf32>
    %527 = arith.addf %524, %526 : vector<2x64xf32>
    %528 = math.tanh %527 : vector<2x64xf32>
    %cst_72 = arith.constant 1.000000e+00 : f32
    %529 = vector.broadcast %cst_72 : f32 to vector<2x64xf32>
    %530 = arith.subf %529, %523 : vector<2x64xf32>
    %531 = arith.mulf %530, %528 : vector<2x64xf32>
    %532 = arith.mulf %523, %508 : vector<2x64xf32>
    %533 = arith.addf %531, %532 : vector<2x64xf32>
    %534 = vector.extract_strided_slice %5 {offsets = [42, 0], sizes = [2, 192], strides = [1, 1]} : vector<44x192xf32> to vector<2x192xf32>
    %535 = arith.truncf %533 : vector<2x64xf32> to vector<2x64xbf16>
    %cst_73 = arith.constant dense<0.000000e+00> : vector<2x192xf32>
    %536 = tpu.matmul %535, %6, %cst_73 {dimension_numbers = #tpu.dot_dimension_numbers<[1], [0], [0], [1], [0, 0, 1, 1], [], []>} : vector<2x64xbf16>, vector<64x192xbf16>, vector<2x192xf32> -> vector<2x192xf32>
    %537 = vector.broadcast %7 : vector<1x192xf32> to vector<2x192xf32>
    %538 = arith.addf %536, %537 : vector<2x192xf32>
    %539 = vector.extract_strided_slice %534 {offsets = [0, 0], sizes = [2, 128], strides = [1, 1]} : vector<2x192xf32> to vector<2x128xf32>
    %540 = vector.extract_strided_slice %538 {offsets = [0, 0], sizes = [2, 128], strides = [1, 1]} : vector<2x192xf32> to vector<2x128xf32>
    %541 = arith.addf %539, %540 : vector<2x128xf32>
    %542 = arith.negf %541 : vector<2x128xf32>
    %543 = math.exp %542 : vector<2x128xf32>
    %cst_74 = arith.constant 1.000000e+00 : f32
    %544 = vector.broadcast %cst_74 : f32 to vector<2x128xf32>
    %545 = arith.addf %544, %543 : vector<2x128xf32>
    %546 = arith.divf %544, %545 : vector<2x128xf32>
    %547 = vector.extract_strided_slice %546 {offsets = [0, 0], sizes = [2, 64], strides = [1, 1]} : vector<2x128xf32> to vector<2x64xf32>
    %548 = vector.extract_strided_slice %546 {offsets = [0, 64], sizes = [2, 64], strides = [1, 1]} : vector<2x128xf32> to vector<2x64xf32>
    %549 = vector.extract_strided_slice %534 {offsets = [0, 128], sizes = [2, 64], strides = [1, 1]} : vector<2x192xf32> to vector<2x64xf32>
    %550 = vector.extract_strided_slice %538 {offsets = [0, 128], sizes = [2, 64], strides = [1, 1]} : vector<2x192xf32> to vector<2x64xf32>
    %551 = arith.mulf %547, %550 : vector<2x64xf32>
    %552 = arith.addf %549, %551 : vector<2x64xf32>
    %553 = math.tanh %552 : vector<2x64xf32>
    %cst_75 = arith.constant 1.000000e+00 : f32
    %554 = vector.broadcast %cst_75 : f32 to vector<2x64xf32>
    %555 = arith.subf %554, %548 : vector<2x64xf32>
    %556 = arith.mulf %555, %553 : vector<2x64xf32>
    %557 = arith.mulf %548, %533 : vector<2x64xf32>
    %558 = arith.addf %556, %557 : vector<2x64xf32>
    %c0_76 = arith.constant 0 : index
    %c0_77 = arith.constant 0 : index
    %559 = vector.load %arg5[%c0_76, %c0_77] : memref<64x6xf32, #tpu.memory_space<vmem>>, vector<64x6xf32>
    %cst_78 = arith.constant dense<0.000000e+00> : vector<2x6xf32>
    %560 = tpu.matmul %558, %559, %cst_78 {dimension_numbers = #tpu.dot_dimension_numbers<[1], [0], [0], [1], [0, 0, 1, 1], [], []>} : vector<2x64xf32>, vector<64x6xf32>, vector<2x6xf32> -> vector<2x6xf32>
    %c0_79 = arith.constant 0 : index
    %c0_80 = arith.constant 0 : index
    %561 = vector.load %arg6[%c0_79, %c0_80] : memref<1x6xf32, #tpu.memory_space<vmem>>, vector<1x6xf32>
    %562 = vector.broadcast %561 : vector<1x6xf32> to vector<2x6xf32>
    %563 = arith.addf %560, %562 : vector<2x6xf32>
    %c0_81 = arith.constant 0 : index
    %c0_82 = arith.constant 0 : index
    %564 = vector.load %arg7[%c0_81, %c0_82] : memref<2x6xf32, #tpu.memory_space<vmem>>, vector<2x6xf32>
    tpu.vector_store %arg7[%c0_81, %c0_82], %563 {strides = array<i32>} : memref<2x6xf32, #tpu.memory_space<vmem>>, vector<2x6xf32>,
    return
  }
}

</mosaic_0001>

<llo_original>
// kernel: widar_gru_forward.1
$region0: #{widar_gru_forward.1}
  #allocation0 [shape = 'u32[]', space=smem, size = 0x4, offset = 0x4, fixed_abs, tag = 'smem constant byte address 0x4 - core index']
  #allocation1 [shape = 'u32[72,128]{1,0:T(1,128)}', space=vmem, size = 0x9000, scoped, tag = 'internal scratch']
  %s0 = inlined_call_operand.vmem [shape: bf16[44,400], index: 0, kind: input, shape index: {}]
  %s1 = inlined_call_operand.vmem [shape: bf16[400,192], index: 1, kind: input, shape index: {}]
  %s2 = inlined_call_operand.vmem [shape: bf16[64,192], index: 2, kind: input, shape index: {}]
  %s3 = inlined_call_operand.vmem [shape: f32[1,192], index: 3, kind: input, shape index: {}]
  %s4 = inlined_call_operand.vmem [shape: f32[1,192], index: 4, kind: input, shape index: {}]
  %s5 = inlined_call_operand.vmem [shape: f32[64,6], index: 5, kind: input, shape index: {}]
  %s6 = inlined_call_operand.vmem [shape: f32[1,6], index: 6, kind: input, shape index: {}]
  %s7 = inlined_call_operand.hbm [shape: f32[2,6], index: 7, kind: output, shape index: {}]
  %s8 = sld [smem:[#allocation0]]
  $region38: #{widar_gru_forward.1} parent=0
    _
  %s10 = ssub.s32 1, %s8
  %s11 = scalar_select 0, %s10, %s8
  $region1: #{widar_gru_forward.1} parent=0
    #allocation2 [shape = 'u8[1024]{0}', space=vmem, size = 0x400, scoped, tag = 'output window, operand 0, single buffered']
    #allocation3 [shape = 's32[1]{0}', space=sflag, size = 0x4, scoped, tag = 'scoped memory for widar_gru_forward.1']
    %12 = vsyncpa [#allocation3], 0
    // Predicated region
    $region2: #{widar_gru_forward.1} parent=1 // pred_check
      _
    $region3: #{widar_gru_forward.1} parent=1 // pred_check_branch
      %14 = sbr.rel (0) target = $region5
    $region4: #{widar_gru_forward.1} parent=1 // pred_region
      _
    $region5: #{widar_gru_forward.1} parent=1 // pred_fallthru
      _
    // Predicated region
    $region6: #{widar_gru_forward.1} parent=1 // pred_check
      _
    $region7: #{widar_gru_forward.1} parent=1 // pred_check_branch
      %16 = sbr.rel (0) target = $region9
    $region8: #{widar_gru_forward.1} parent=1 // pred_region
      _
    $region9: #{widar_gru_forward.1} parent=1 // pred_fallthru
      _
    // Predicated region
    $region10: #{widar_gru_forward.1} parent=1 // pred_check
      _
    $region11: #{widar_gru_forward.1} parent=1 // pred_check_branch
      %18 = sbr.rel (0) target = $region13
    $region12: #{widar_gru_forward.1} parent=1 // pred_region
      _
    $region13: #{widar_gru_forward.1} parent=1 // pred_fallthru
      _
    // Predicated region
    $region14: #{widar_gru_forward.1} parent=1 // pred_check
      _
    $region15: #{widar_gru_forward.1} parent=1 // pred_check_branch
      %20 = sbr.rel (0) target = $region17
    $region16: #{widar_gru_forward.1} parent=1 // pred_region
      _
    $region17: #{widar_gru_forward.1} parent=1 // pred_fallthru
      _
    // Predicated region
    $region18: #{widar_gru_forward.1} parent=1 // pred_check
      _
    $region19: #{widar_gru_forward.1} parent=1 // pred_check_branch
      %22 = sbr.rel (0) target = $region21
    $region20: #{widar_gru_forward.1} parent=1 // pred_region
      _
    $region21: #{widar_gru_forward.1} parent=1 // pred_fallthru
      _
    // Predicated region
    $region22: #{widar_gru_forward.1} parent=1 // pred_check
      _
    $region23: #{widar_gru_forward.1} parent=1 // pred_check_branch
      %24 = sbr.rel (0) target = $region25
    $region24: #{widar_gru_forward.1} parent=1 // pred_region
      _
    $region25: #{widar_gru_forward.1} parent=1 // pred_fallthru
      _
    // Predicated region
    $region26: #{widar_gru_forward.1} parent=1 // pred_check
      _
    $region27: #{widar_gru_forward.1} parent=1 // pred_check_branch
      %26 = sbr.rel (0) target = $region29
    $region28: #{widar_gru_forward.1} parent=1 // pred_region
      _
    $region29: #{widar_gru_forward.1} parent=1 // pred_fallthru
      _
    %v28 = vld [vmem:[%s0] sm:$0xff]
    %v29 = vld [vmem:[%s0 + $0x8] sm:$0xff]
    %v30 = vld [vmem:[%s0 + $0x10] sm:$0xff]
    %v31 = vld [vmem:[%s0 + $0x18] sm:$0xff]
    %v32 = vld [vmem:[%s0 + $0x20] sm:$0xff]
    %v33 = vld [vmem:[%s0 + $0x28] sm:$0xff]
    %v34 = vld [vmem:[%s0 + $0x30] sm:$0xff]
    %v35 = vld [vmem:[%s0 + $0x38] sm:$0xff]
    %v36 = vld [vmem:[%s0 + $0x40] sm:$0xff]
    %v37 = vld [vmem:[%s0 + $0x48] sm:$0xff]
    %v38 = vld [vmem:[%s0 + $0x50] sm:$0x33]
    %v39 = vld [vmem:[%s0 + $0x58] sm:$0x33]
    %v40 = vld [vmem:[%s1] sm:$0xff]
    %v41 = vld [vmem:[%s1 + $0x8] sm:$0xff]
    %v42 = vld [vmem:[%s1 + $0x10] sm:$0xff]
    %v43 = vld [vmem:[%s1 + $0x18] sm:$0xff]
    %v44 = vld [vmem:[%s1 + $0x20] sm:$0xff]
    %v45 = vld [vmem:[%s1 + $0x28] sm:$0xff]
    %v46 = vld [vmem:[%s1 + $0x30] sm:$0xff]
    %v47 = vld [vmem:[%s1 + $0x38] sm:$0xff]
    %v48 = vld [vmem:[%s1 + $0x40] sm:$0xff]
    %v49 = vld [vmem:[%s1 + $0x48] sm:$0xff]
    %v50 = vld [vmem:[%s1 + $0x50] sm:$0xff]
    %v51 = vld [vmem:[%s1 + $0x58] sm:$0xff]
    %v52 = vld [vmem:[%s1 + $0x60] sm:$0xff]
    %v53 = vld [vmem:[%s1 + $0x68] sm:$0xff]
    %v54 = vld [vmem:[%s1 + $0x70] sm:$0xff]
    %v55 = vld [vmem:[%s1 + $0x78] sm:$0xff]
    %v56 = vld [vmem:[%s1 + $0x80] sm:$0xff]
    %v57 = vld [vmem:[%s1 + $0x88] sm:$0xff]
    %v58 = vld [vmem:[%s1 + $0x90] sm:$0xff]
    %v59 = vld [vmem:[%s1 + $0x98] sm:$0xff]
    %v60 = vld [vmem:[%s1 + $0xa0] sm:$0xff]
    %v61 = vld [vmem:[%s1 + $0xa8] sm:$0xff]
    %v62 = vld [vmem:[%s1 + $0xb0] sm:$0xff]
    %v63 = vld [vmem:[%s1 + $0xb8] sm:$0xff]
    %v64 = vld [vmem:[%s1 + $0xc0] sm:$0xff]
    %v65 = vld [vmem:[%s1 + $0xc8] sm:$0xff]
    %v66 = vld [vmem:[%s1 + $0xd0] sm:$0xff]
    %v67 = vld [vmem:[%s1 + $0xd8] sm:$0xff]
    %v68 = vld [vmem:[%s1 + $0xe0] sm:$0xff]
    %v69 = vld [vmem:[%s1 + $0xe8] sm:$0xff]
    %v70 = vld [vmem:[%s1 + $0xf0] sm:$0xff]
    %v71 = vld [vmem:[%s1 + $0xf8] sm:$0xff]
    %v72 = vld [vmem:[%s1 + $0x100] sm:$0xff]
    %v73 = vld [vmem:[%s1 + $0x108] sm:$0xff]
    %v74 = vld [vmem:[%s1 + $0x110] sm:$0xff]
    %v75 = vld [vmem:[%s1 + $0x118] sm:$0xff]
    %v76 = vld [vmem:[%s1 + $0x120] sm:$0xff]
    %v77 = vld [vmem:[%s1 + $0x128] sm:$0xff]
    %v78 = vld [vmem:[%s1 + $0x130] sm:$0xff]
    %v79 = vld [vmem:[%s1 + $0x138] sm:$0xff]
    %v80 = vld [vmem:[%s1 + $0x140] sm:$0xff]
    %v81 = vld [vmem:[%s1 + $0x148] sm:$0xff]
    %v82 = vld [vmem:[%s1 + $0x150] sm:$0xff]
    %v83 = vld [vmem:[%s1 + $0x158] sm:$0xff]
    %v84 = vld [vmem:[%s1 + $0x160] sm:$0xff]
    %v85 = vld [vmem:[%s1 + $0x168] sm:$0xff]
    %v86 = vld [vmem:[%s1 + $0x170] sm:$0xff]
    %v87 = vld [vmem:[%s1 + $0x178] sm:$0xff]
    %v88 = vld [vmem:[%s1 + $0x180] sm:$0xff]
    %v89 = vld [vmem:[%s1 + $0x188] sm:$0xff]
    %v90 = vld [vmem:[%s3] sm:$0x3]
    %v92 = vperm.slane %v90, 0
    %v93 = vperm.slane %v90, 1
    %v108 = vunpack.c.l.b16 %v28
    %v109 = vunpack.c.h.b16 %v28
    %v110 = vunpack.c.l.b16 %v29
    %v111 = vunpack.c.h.b16 %v29
    %v112 = vunpack.c.l.b16 %v30
    %v113 = vunpack.c.h.b16 %v30
    %v114 = vunpack.c.l.b16 %v31
    %v115 = vunpack.c.h.b16 %v31
    %v116 = vunpack.c.l.b16 %v32
    %v117 = vunpack.c.h.b16 %v32
    %v118 = vunpack.c.l.b16 %v33
    %v119 = vunpack.c.h.b16 %v33
    %v120 = vunpack.c.l.b16 %v34
    %v121 = vunpack.c.h.b16 %v34
    %v122 = vunpack.c.l.b16 %v35
    %v123 = vunpack.c.h.b16 %v35
    %v124 = vunpack.c.l.b16 %v36
    %v125 = vunpack.c.h.b16 %v36
    %v126 = vunpack.c.l.b16 %v37
    %v127 = vunpack.c.h.b16 %v37
    %v128 = vunpack.c.l.b16 %v38
    %v129 = vunpack.c.h.b16 %v38
    %v130 = vunpack.c.l.b16 %v39
    %v131 = vunpack.c.h.b16 %v39
    %v132 = vpack.c.b16 %v112, %v108
    %v133 = vpack.c.b16 %v113, %v109
    %v134 = vpack.c.b16 %v114, %v110
    %v135 = vpack.c.b16 %v115, %v111
    %v136 = vpack.c.b16 %v120, %v116
    %v137 = vpack.c.b16 %v121, %v117
    %v138 = vpack.c.b16 %v122, %v118
    %v139 = vpack.c.b16 %v123, %v119
    %v140 = vpack.c.b16 %v128, %v124
    %v141 = vpack.c.b16 %v129, %v125
    %v142 = vpack.c.b16 %v130, %v126
    %v143 = vpack.c.b16 %v131, %v127
    %v203 = vunpack.c.l.b16 %v40
    %v204 = vunpack.c.h.b16 %v40
    %v205 = vunpack.c.l.b16 %v41
    %v206 = vunpack.c.h.b16 %v41
    %v207 = vunpack.c.l.b16 %v42
    %v208 = vunpack.c.h.b16 %v42
    %v209 = vunpack.c.l.b16 %v43
    %v210 = vunpack.c.h.b16 %v43
    %v211 = vunpack.c.l.b16 %v44
    %v212 = vunpack.c.h.b16 %v44
    %v213 = vunpack.c.l.b16 %v45
    %v214 = vunpack.c.h.b16 %v45
    %v215 = vunpack.c.l.b16 %v46
    %v216 = vunpack.c.h.b16 %v46
    %v217 = vunpack.c.l.b16 %v47
    %v218 = vunpack.c.h.b16 %v47
    %v219 = vunpack.c.l.b16 %v48
    %v220 = vunpack.c.h.b16 %v48
    %v221 = vunpack.c.l.b16 %v49
    %v222 = vunpack.c.h.b16 %v49
    %v223 = vunpack.c.l.b16 %v50
    %v224 = vunpack.c.h.b16 %v50
    %v225 = vunpack.c.l.b16 %v51
    %v226 = vunpack.c.h.b16 %v51
    %v227 = vunpack.c.l.b16 %v52
    %v228 = vunpack.c.h.b16 %v52
    %v229 = vunpack.c.l.b16 %v53
    %v230 = vunpack.c.h.b16 %v53
    %v231 = vunpack.c.l.b16 %v54
    %v232 = vunpack.c.h.b16 %v54
    %v233 = vunpack.c.l.b16 %v55
    %v234 = vunpack.c.h.b16 %v55
    %v235 = vunpack.c.l.b16 %v56
    %v236 = vunpack.c.h.b16 %v56
    %v237 = vunpack.c.l.b16 %v57
    %v238 = vunpack.c.h.b16 %v57
    %v239 = vunpack.c.l.b16 %v58
    %v240 = vunpack.c.h.b16 %v58
    %v241 = vunpack.c.l.b16 %v59
    %v242 = vunpack.c.h.b16 %v59
    %v243 = vunpack.c.l.b16 %v60
    %v244 = vunpack.c.h.b16 %v60
    %v245 = vunpack.c.l.b16 %v61
    %v246 = vunpack.c.h.b16 %v61
    %v247 = vunpack.c.l.b16 %v62
    %v248 = vunpack.c.h.b16 %v62
    %v249 = vunpack.c.l.b16 %v63
    %v250 = vunpack.c.h.b16 %v63
    %v251 = vunpack.c.l.b16 %v64
    %v252 = vunpack.c.h.b16 %v64
    %v253 = vunpack.c.l.b16 %v65
    %v254 = vunpack.c.h.b16 %v65
    %v255 = vunpack.c.l.b16 %v66
    %v256 = vunpack.c.h.b16 %v66
    %v257 = vunpack.c.l.b16 %v67
    %v258 = vunpack.c.h.b16 %v67
    %v259 = vunpack.c.l.b16 %v68
    %v260 = vunpack.c.h.b16 %v68
    %v261 = vunpack.c.l.b16 %v69
    %v262 = vunpack.c.h.b16 %v69
    %v263 = vunpack.c.l.b16 %v70
    %v264 = vunpack.c.h.b16 %v70
    %v265 = vunpack.c.l.b16 %v71
    %v266 = vunpack.c.h.b16 %v71
    %v267 = vunpack.c.l.b16 %v72
    %v268 = vunpack.c.h.b16 %v72
    %v269 = vunpack.c.l.b16 %v73
    %v270 = vunpack.c.h.b16 %v73
    %v271 = vunpack.c.l.b16 %v74
    %v272 = vunpack.c.h.b16 %v74
    %v273 = vunpack.c.l.b16 %v75
    %v274 = vunpack.c.h.b16 %v75
    %v275 = vunpack.c.l.b16 %v76
    %v276 = vunpack.c.h.b16 %v76
    %v277 = vunpack.c.l.b16 %v77
    %v278 = vunpack.c.h.b16 %v77
    %v279 = vunpack.c.l.b16 %v78
    %v280 = vunpack.c.h.b16 %v78
    %v281 = vunpack.c.l.b16 %v79
    %v282 = vunpack.c.h.b16 %v79
    %v283 = vunpack.c.l.b16 %v80
    %v284 = vunpack.c.h.b16 %v80
    %v285 = vunpack.c.l.b16 %v81
    %v286 = vunpack.c.h.b16 %v81
    %v287 = vunpack.c.l.b16 %v82
    %v288 = vunpack.c.h.b16 %v82
    %v289 = vunpack.c.l.b16 %v83
    %v290 = vunpack.c.h.b16 %v83
    %v291 = vunpack.c.l.b16 %v84
    %v292 = vunpack.c.h.b16 %v84
    %v293 = vunpack.c.l.b16 %v85
    %v294 = vunpack.c.h.b16 %v85
    %v295 = vunpack.c.l.b16 %v86
    %v296 = vunpack.c.h.b16 %v86
    %v297 = vunpack.c.l.b16 %v87
    %v298 = vunpack.c.h.b16 %v87
    %v299 = vunpack.c.l.b16 %v88
    %v300 = vunpack.c.h.b16 %v88
    %v301 = vunpack.c.l.b16 %v89
    %v302 = vunpack.c.h.b16 %v89
    %v303 = vpack.c.b16 %v205, %v203
    %v304 = vpack.c.b16 %v206, %v204
    %v305 = vpack.c.b16 %v209, %v207
    %v306 = vpack.c.b16 %v210, %v208
    %v307 = vpack.c.b16 %v213, %v211
    %v308 = vpack.c.b16 %v214, %v212
    %v309 = vpack.c.b16 %v217, %v215
    %v310 = vpack.c.b16 %v218, %v216
    %v311 = vpack.c.b16 %v221, %v219
    %v312 = vpack.c.b16 %v222, %v220
    %v313 = vpack.c.b16 %v225, %v223
    %v314 = vpack.c.b16 %v226, %v224
    %v315 = vpack.c.b16 %v229, %v227
    %v316 = vpack.c.b16 %v230, %v228
    %v317 = vpack.c.b16 %v233, %v231
    %v318 = vpack.c.b16 %v234, %v232
    %v319 = vpack.c.b16 %v237, %v235
    %v320 = vpack.c.b16 %v238, %v236
    %v321 = vpack.c.b16 %v241, %v239
    %v322 = vpack.c.b16 %v242, %v240
    %v323 = vpack.c.b16 %v245, %v243
    %v324 = vpack.c.b16 %v246, %v244
    %v325 = vpack.c.b16 %v249, %v247
    %v326 = vpack.c.b16 %v250, %v248
    %v327 = vpack.c.b16 %v253, %v251
    %v328 = vpack.c.b16 %v254, %v252
    %v329 = vpack.c.b16 %v257, %v255
    %v330 = vpack.c.b16 %v258, %v256
    %v331 = vpack.c.b16 %v261, %v259
    %v332 = vpack.c.b16 %v262, %v260
    %v333 = vpack.c.b16 %v265, %v263
    %v334 = vpack.c.b16 %v266, %v264
    %v335 = vpack.c.b16 %v269, %v267
    %v336 = vpack.c.b16 %v270, %v268
    %v337 = vpack.c.b16 %v273, %v271
    %v338 = vpack.c.b16 %v274, %v272
    %v339 = vpack.c.b16 %v277, %v275
    %v340 = vpack.c.b16 %v278, %v276
    %v341 = vpack.c.b16 %v281, %v279
    %v342 = vpack.c.b16 %v282, %v280
    %v343 = vpack.c.b16 %v285, %v283
    %v344 = vpack.c.b16 %v286, %v284
    %v345 = vpack.c.b16 %v289, %v287
    %v346 = vpack.c.b16 %v290, %v288
    %v347 = vpack.c.b16 %v293, %v291
    %v348 = vpack.c.b16 %v294, %v292
    %v349 = vpack.c.b16 %v297, %v295
    %v350 = vpack.c.b16 %v298, %v296
    %v351 = vpack.c.b16 %v301, %v299
    %v352 = vpack.c.b16 %v302, %v300
    %vm403 = vcmask 130048
    %v405 = vsel %vm403, %v135, 0
    %v408 = vsel %vm403, %v139, 0
    %v411 = vsel %vm403, %v143, 0
    %413 = vmatpush.bf16.msra.mxu0 %v317
    %414 = vmatpush.bf16.msra.mxu0 %v315
    %415 = vmatpush.bf16.msra.mxu0 %v313
    %416 = vmatpush.bf16.msra.mxu0 %v311
    %417 = vmatpush.bf16.msra.mxu0 %v309
    %418 = vmatpush.bf16.msra.mxu0 %v307
    %419 = vmatpush.bf16.msra.mxu0 %v305
    %420 = vmatpush.bf16.msra.mxu0 %v303
    %421 = vmatmul.bf16.gmra.mxu0 %v132
    %v422 = vpop.f32.mrf.mxu0
    %v423 = vadd.f32 %v92, %v422
    %v424 = vpop.f32.mrf.mxu0
    %v425 = vadd.f32 %v92, %v424
    %426 = vmatmul.bf16.gmra.mxu0 %v136
    %v427 = vpop.f32.mrf.mxu0
    %v428 = vadd.f32 %v92, %v427
    %v429 = vpop.f32.mrf.mxu0
    %v430 = vadd.f32 %v92, %v429
    %431 = vmatmul.bf16.gmra.mxu0 %v140
    %v432 = vpop.f32.mrf.mxu0
    %v433 = vadd.f32 %v92, %v432
    %v434 = vpop.f32.mrf.mxu0
    %v435 = vadd.f32 %v92, %v434
    %436 = vdwg.mxu0
    %437 = vmatpush.bf16.msra.mxu0 %v333
    %438 = vmatpush.bf16.msra.mxu0 %v331
    %439 = vmatpush.bf16.msra.mxu0 %v329
    %440 = vmatpush.bf16.msra.mxu0 %v327
    %441 = vmatpush.bf16.msra.mxu0 %v325
    %442 = vmatpush.bf16.msra.mxu0 %v323
    %443 = vmatpush.bf16.msra.mxu0 %v321
    %444 = vmatpush.bf16.msra.mxu0 %v319
    %445 = vmatmul.bf16.gmra.mxu0 %v133
    %v446 = vpop.f32.mrf.mxu0
    %v447 = vadd.f32 %v423, %v446
    %v448 = vpop.f32.mrf.mxu0
    %v449 = vadd.f32 %v425, %v448
    %450 = vmatmul.bf16.gmra.mxu0 %v137
    %v451 = vpop.f32.mrf.mxu0
    %v452 = vadd.f32 %v428, %v451
    %v453 = vpop.f32.mrf.mxu0
    %v454 = vadd.f32 %v430, %v453
    %455 = vmatmul.bf16.gmra.mxu0 %v141
    %v456 = vpop.f32.mrf.mxu0
    %v457 = vadd.f32 %v433, %v456
    %v458 = vpop.f32.mrf.mxu0
    %v459 = vadd.f32 %v435, %v458
    %460 = vdwg.mxu0
    %461 = vmatpush.bf16.msra.mxu0 %v349
    %462 = vmatpush.bf16.msra.mxu0 %v347
    %463 = vmatpush.bf16.msra.mxu0 %v345
    %464 = vmatpush.bf16.msra.mxu0 %v343
    %465 = vmatpush.bf16.msra.mxu0 %v341
    %466 = vmatpush.bf16.msra.mxu0 %v339
    %467 = vmatpush.bf16.msra.mxu0 %v337
    %468 = vmatpush.bf16.msra.mxu0 %v335
    %469 = vmatmul.bf16.gmra.mxu0 %v134
    %v470 = vpop.f32.mrf.mxu0
    %v471 = vadd.f32 %v447, %v470
    %v472 = vpop.f32.mrf.mxu0
    %v473 = vadd.f32 %v449, %v472
    %474 = vmatmul.bf16.gmra.mxu0 %v138
    %v475 = vpop.f32.mrf.mxu0
    %v476 = vadd.f32 %v452, %v475
    %v477 = vpop.f32.mrf.mxu0
    %v478 = vadd.f32 %v454, %v477
    %479 = vmatmul.bf16.gmra.mxu0 %v142
    %v480 = vpop.f32.mrf.mxu0
    %v481 = vadd.f32 %v457, %v480
    %v482 = vpop.f32.mrf.mxu0
    %v483 = vadd.f32 %v459, %v482
    %484 = vdwg.mxu0
    %485 = vmatpush.bf16.msra.mxu0 0
    %486 = vmatpush.bf16.msra.mxu0 0
    %487 = vmatpush.bf16.msra.mxu0 0
    %488 = vmatpush.bf16.msra.mxu0 0
    %489 = vmatpush.bf16.msra.mxu0 0
    %490 = vmatpush.bf16.msra.mxu0 0
    %491 = vmatpush.bf16.msra.mxu0 0
    %492 = vmatpush.bf16.msra.mxu0 %v351
    %493 = vmatmul.bf16.gmra.mxu0 %v405
    %v494 = vpop.f32.mrf.mxu0
    %v495 = vadd.f32 %v471, %v494
    %v496 = vpop.f32.mrf.mxu0
    %v497 = vadd.f32 %v473, %v496
    %498 = vmatmul.bf16.gmra.mxu0 %v408
    %v499 = vpop.f32.mrf.mxu0
    %v500 = vadd.f32 %v476, %v499
    %v501 = vpop.f32.mrf.mxu0
    %v502 = vadd.f32 %v478, %v501
    %503 = vmatmul.bf16.gmra.mxu0 %v411
    %v504 = vpop.f32.mrf.mxu0
    %v505 = vadd.f32 %v481, %v504
    %v506 = vpop.f32.mrf.mxu0
    %v507 = vadd.f32 %v483, %v506
    %508 = vdwg.mxu0
    %509 = vmatpush.bf16.msra.mxu0 %v318
    %510 = vmatpush.bf16.msra.mxu0 %v316
    %511 = vmatpush.bf16.msra.mxu0 %v314
    %512 = vmatpush.bf16.msra.mxu0 %v312
    %513 = vmatpush.bf16.msra.mxu0 %v310
    %514 = vmatpush.bf16.msra.mxu0 %v308
    %515 = vmatpush.bf16.msra.mxu0 %v306
    %516 = vmatpush.bf16.msra.mxu0 %v304
    %517 = vmatmul.bf16.gmra.mxu0 %v132
    %v518 = vpop.f32.mrf.mxu0
    %v519 = vadd.f32 %v93, %v518
    %v520 = vpop.f32.mrf.mxu0
    %v521 = vadd.f32 %v93, %v520
    %522 = vmatmul.bf16.gmra.mxu0 %v136
    %v523 = vpop.f32.mrf.mxu0
    %v524 = vadd.f32 %v93, %v523
    %v525 = vpop.f32.mrf.mxu0
    %v526 = vadd.f32 %v93, %v525
    %527 = vmatmul.bf16.gmra.mxu0 %v140
    %v528 = vpop.f32.mrf.mxu0
    %v529 = vadd.f32 %v93, %v528
    %v530 = vpop.f32.mrf.mxu0
    %v531 = vadd.f32 %v93, %v530
    %532 = vdwg.mxu0
    %533 = vmatpush.bf16.msra.mxu0 %v334
    %534 = vmatpush.bf16.msra.mxu0 %v332
    %535 = vmatpush.bf16.msra.mxu0 %v330
    %536 = vmatpush.bf16.msra.mxu0 %v328
    %537 = vmatpush.bf16.msra.mxu0 %v326
    %538 = vmatpush.bf16.msra.mxu0 %v324
    %539 = vmatpush.bf16.msra.mxu0 %v322
    %540 = vmatpush.bf16.msra.mxu0 %v320
    %541 = vmatmul.bf16.gmra.mxu0 %v133
    %v542 = vpop.f32.mrf.mxu0
    %v543 = vadd.f32 %v519, %v542
    %v544 = vpop.f32.mrf.mxu0
    %v545 = vadd.f32 %v521, %v544
    %546 = vmatmul.bf16.gmra.mxu0 %v137
    %v547 = vpop.f32.mrf.mxu0
    %v548 = vadd.f32 %v524, %v547
    %v549 = vpop.f32.mrf.mxu0
    %v550 = vadd.f32 %v526, %v549
    %551 = vmatmul.bf16.gmra.mxu0 %v141
    %v552 = vpop.f32.mrf.mxu0
    %v553 = vadd.f32 %v529, %v552
    %v554 = vpop.f32.mrf.mxu0
    %v555 = vadd.f32 %v531, %v554
    %556 = vdwg.mxu0
    %557 = vmatpush.bf16.msra.mxu0 %v350
    %558 = vmatpush.bf16.msra.mxu0 %v348
    %559 = vmatpush.bf16.msra.mxu0 %v346
    %560 = vmatpush.bf16.msra.mxu0 %v344
    %561 = vmatpush.bf16.msra.mxu0 %v342
    %562 = vmatpush.bf16.msra.mxu0 %v340
    %563 = vmatpush.bf16.msra.mxu0 %v338
    %564 = vmatpush.bf16.msra.mxu0 %v336
    %565 = vmatmul.bf16.gmra.mxu0 %v134
    %v566 = vpop.f32.mrf.mxu0
    %v567 = vadd.f32 %v543, %v566
    %v568 = vpop.f32.mrf.mxu0
    %v569 = vadd.f32 %v545, %v568
    %570 = vmatmul.bf16.gmra.mxu0 %v138
    %v571 = vpop.f32.mrf.mxu0
    %v572 = vadd.f32 %v548, %v571
    %v573 = vpop.f32.mrf.mxu0
    %v574 = vadd.f32 %v550, %v573
    %575 = vmatmul.bf16.gmra.mxu0 %v142
    %v576 = vpop.f32.mrf.mxu0
    %v577 = vadd.f32 %v553, %v576
    %v578 = vpop.f32.mrf.mxu0
    %v579 = vadd.f32 %v555, %v578
    %580 = vdwg.mxu0
    %581 = vmatpush.bf16.msra.mxu0 0
    %582 = vmatpush.bf16.msra.mxu0 0
    %583 = vmatpush.bf16.msra.mxu0 0
    %584 = vmatpush.bf16.msra.mxu0 0
    %585 = vmatpush.bf16.msra.mxu0 0
    %586 = vmatpush.bf16.msra.mxu0 0
    %587 = vmatpush.bf16.msra.mxu0 0
    %588 = vmatpush.bf16.msra.mxu0 %v352
    %589 = vmatmul.bf16.gmra.mxu0 %v405
    %v590 = vpop.f32.mrf.mxu0
    %v591 = vadd.f32 %v567, %v590
    %v592 = vpop.f32.mrf.mxu0
    %v593 = vadd.f32 %v569, %v592
    %594 = vmatmul.bf16.gmra.mxu0 %v408
    %v595 = vpop.f32.mrf.mxu0
    %v596 = vadd.f32 %v572, %v595
    %v597 = vpop.f32.mrf.mxu0
    %v598 = vadd.f32 %v574, %v597
    %599 = vmatmul.bf16.gmra.mxu0 %v411
    %v600 = vpop.f32.mrf.mxu0
    %v601 = vadd.f32 %v577, %v600
    %v602 = vpop.f32.mrf.mxu0
    %v603 = vadd.f32 %v579, %v602
    %604 = vdwg.mxu0
    %v605 = vld [vmem:[%s2] sm:$0xff]
    %v606 = vld [vmem:[%s2 + $0x8] sm:$0xff]
    %v607 = vld [vmem:[%s2 + $0x10] sm:$0xff]
    %v608 = vld [vmem:[%s2 + $0x18] sm:$0xff]
    %v609 = vld [vmem:[%s2 + $0x20] sm:$0xff]
    %v610 = vld [vmem:[%s2 + $0x28] sm:$0xff]
    %v611 = vld [vmem:[%s2 + $0x30] sm:$0xff]
    %v612 = vld [vmem:[%s2 + $0x38] sm:$0xff]
    %v613 = vld [vmem:[%s4] sm:$0x3]
    %v615 = vperm.slane %v613, 0
    %v616 = vperm.slane %v613, 1
    %v627 = vunpack.c.l.b16 %v605
    %v628 = vunpack.c.h.b16 %v605
    %v629 = vunpack.c.l.b16 %v606
    %v630 = vunpack.c.h.b16 %v606
    %v631 = vunpack.c.l.b16 %v607
    %v632 = vunpack.c.h.b16 %v607
    %v633 = vunpack.c.l.b16 %v608
    %v634 = vunpack.c.h.b16 %v608
    %v635 = vunpack.c.l.b16 %v609
    %v636 = vunpack.c.h.b16 %v609
    %v637 = vunpack.c.l.b16 %v610
    %v638 = vunpack.c.h.b16 %v610
    %v639 = vunpack.c.l.b16 %v611
    %v640 = vunpack.c.h.b16 %v611
    %v641 = vunpack.c.l.b16 %v612
    %v642 = vunpack.c.h.b16 %v612
    %v643 = vpack.c.b16 %v629, %v627
    %v644 = vpack.c.b16 %v630, %v628
    %v645 = vpack.c.b16 %v633, %v631
    %v646 = vpack.c.b16 %v634, %v632
    %v647 = vpack.c.b16 %v637, %v635
    %v648 = vpack.c.b16 %v638, %v636
    %v649 = vpack.c.b16 %v641, %v639
    %v650 = vpack.c.b16 %v642, %v640
    %vm659 = vcmask 523264
    %v661 = vsel %vm659, 0, 0
    %663 = vmatpush.bf16.msra.mxu0 0
    %664 = vmatpush.bf16.msra.mxu0 0
    %665 = vmatpush.bf16.msra.mxu0 0
    %666 = vmatpush.bf16.msra.mxu0 0
    %667 = vmatpush.bf16.msra.mxu0 %v649
    %668 = vmatpush.bf16.msra.mxu0 %v647
    %669 = vmatpush.bf16.msra.mxu0 %v645
    %670 = vmatpush.bf16.msra.mxu0 %v643
    %671 = vmatmul.bf16.gmra.mxu0 %v661
    %v672 = vpop.f32.mrf.mxu0
    %v673 = vadd.f32 %v615, %v672
    %v674 = vpop.f32.mrf.mxu0
    %675 = vdwg.mxu0
    %676 = vmatpush.bf16.msra.mxu0 0
    %677 = vmatpush.bf16.msra.mxu0 0
    %678 = vmatpush.bf16.msra.mxu0 0
    %679 = vmatpush.bf16.msra.mxu0 0
    %680 = vmatpush.bf16.msra.mxu0 %v650
    %681 = vmatpush.bf16.msra.mxu0 %v648
    %682 = vmatpush.bf16.msra.mxu0 %v646
    %683 = vmatpush.bf16.msra.mxu0 %v644
    %684 = vmatmul.bf16.gmra.mxu0 %v661
    %v685 = vpop.f32.mrf.mxu0
    %v686 = vadd.f32 %v616, %v685
    %v687 = vpop.f32.mrf.mxu0
    %688 = vdwg.mxu0
    %v689 = vadd.f32 %v495, %v673
    %v690 = vxor.u32 %v689, 2147483648
    %v691 = vmul.f32 %v690, 1.442695
    %v692 = vpow.pop %v691
    %v693 = vadd.f32 %v692, 1.0
    %v694 = vrcp.pop %v693
    %v695 = vmul.f32 %v693, %v694
    %v696 = vsub.f32 1.0, %v695
    %v697 = vmul.f32 %v694, %v696
    %v698 = vadd.f32 %v694, %v697
    %vm699 = vweird.f32 %v693
    %vm700 = vweird.f32 %v694
    %vm701 = vmor %vm699, %vm700
    %v702 = vsel %vm701, %v694, %v698
    %v703 = vand.u32 2147483647, %v693
    %vm704 = vcmp.eq.f32.partialorder %v703, 8.507059e+37
    %v705 = vand.u32 %v693, 2147483648
    %v706 = vor.u32 1.1754944e-38, %v705
    %v707 = vsel %vm704, %v706, %v702
    %v708 = vmul.f32 1.0, %v707
    %v709 = vmul.f32 %v708, %v686
    %v710 = vadd.f32 %v591, %v709
    %v711 = vtanh.pop %v710
    %v712 = vsub.f32 1.0, %v708
    %714 = vrot.lane.b32.xlu0 %v711, 64
    %v715 = vpop.permute.xlu0 %714
    %v717 = vmul.f32 %v712, %v715
    %v718 = vmul.f32 %v708, 0.0
    %v719 = vadd.f32 %v717, %v718
    %v720 = vpack.c.bf16 %v719, %v719
    %722 = vrot.lane.b32.xlu0 %v720, 64
    %v723 = vpop.permute.xlu0 %722
    %v725 = vsel %vm659, %v723, 0
    %727 = vmatpush.bf16.msra.mxu0 0
    %728 = vmatpush.bf16.msra.mxu0 0
    %729 = vmatpush.bf16.msra.mxu0 0
    %730 = vmatpush.bf16.msra.mxu0 0
    %731 = vmatpush.bf16.msra.mxu0 %v649
    %732 = vmatpush.bf16.msra.mxu0 %v647
    %733 = vmatpush.bf16.msra.mxu0 %v645
    %734 = vmatpush.bf16.msra.mxu0 %v643
    %735 = vmatmul.bf16.gmra.mxu0 %v725
    %v736 = vpop.f32.mrf.mxu0
    %v737 = vadd.f32 %v615, %v736
    %v738 = vpop.f32.mrf.mxu0
    %739 = vdwg.mxu0
    %740 = vmatpush.bf16.msra.mxu0 0
    %741 = vmatpush.bf16.msra.mxu0 0
    %742 = vmatpush.bf16.msra.mxu0 0
    %743 = vmatpush.bf16.msra.mxu0 0
    %744 = vmatpush.bf16.msra.mxu0 %v650
    %745 = vmatpush.bf16.msra.mxu0 %v648
    %746 = vmatpush.bf16.msra.mxu0 %v646
    %747 = vmatpush.bf16.msra.mxu0 %v644
    %748 = vmatmul.bf16.gmra.mxu0 %v725
    %v749 = vpop.f32.mrf.mxu0
    %v750 = vadd.f32 %v616, %v749
    %v751 = vpop.f32.mrf.mxu0
    %752 = vdwg.mxu0
    %v754 = vrot.slane %v737, 6
    %v756 = vadd.f32 %v495, %v754
    %v757 = vxor.u32 %v756, 2147483648
    %v758 = vmul.f32 %v757, 1.442695
    %v759 = vpow.pop %v758
    %v760 = vadd.f32 %v759, 1.0
    %v761 = vrcp.pop %v760
    %v762 = vmul.f32 %v760, %v761
    %v763 = vsub.f32 1.0, %v762
    %v764 = vmul.f32 %v761, %v763
    %v765 = vadd.f32 %v761, %v764
    %vm766 = vweird.f32 %v760
    %vm767 = vweird.f32 %v761
    %vm768 = vmor %vm766, %vm767
    %v769 = vsel %vm768, %v761, %v765
    %v770 = vand.u32 2147483647, %v760
    %vm771 = vcmp.eq.f32.partialorder %v770, 8.507059e+37
    %v772 = vand.u32 %v760, 2147483648
    %v773 = vor.u32 1.1754944e-38, %v772
    %v774 = vsel %vm771, %v773, %v769
    %v775 = vmul.f32 1.0, %v774
    %v777 = vrot.slane %v750, 6
    %v779 = vmul.f32 %v775, %v777
    %v780 = vadd.f32 %v591, %v779
    %v781 = vtanh.pop %v780
    %v782 = vsub.f32 1.0, %v775
    %784 = vrot.lane.b32.xlu0 %v781, 64
    %v785 = vpop.permute.xlu0 %784
    %v787 = vmul.f32 %v782, %v785
    %v789 = vrot.slane %v719, 6
    %v791 = vmul.f32 %v775, %v789
    %v792 = vadd.f32 %v787, %v791
    %v793 = vpack.c.bf16 %v792, %v792
    %v795 = vrot.slane %v793, 1
    %796 = vrot.lane.b32.xlu0 %v795, 64
    %v797 = vpop.permute.xlu0 %796
    %v799 = vsel %vm659, %v797, 0
    %801 = vmatpush.bf16.msra.mxu0 0
    %802 = vmatpush.bf16.msra.mxu0 0
    %803 = vmatpush.bf16.msra.mxu0 0
    %804 = vmatpush.bf16.msra.mxu0 0
    %805 = vmatpush.bf16.msra.mxu0 %v649
    %806 = vmatpush.bf16.msra.mxu0 %v647
    %807 = vmatpush.bf16.msra.mxu0 %v645
    %808 = vmatpush.bf16.msra.mxu0 %v643
    %809 = vmatmul.bf16.gmra.mxu0 %v799
    %v810 = vpop.f32.mrf.mxu0
    %v811 = vadd.f32 %v615, %v810
    %v812 = vpop.f32.mrf.mxu0
    %813 = vdwg.mxu0
    %814 = vmatpush.bf16.msra.mxu0 0
    %815 = vmatpush.bf16.msra.mxu0 0
    %816 = vmatpush.bf16.msra.mxu0 0
    %817 = vmatpush.bf16.msra.mxu0 0
    %818 = vmatpush.bf16.msra.mxu0 %v650
    %819 = vmatpush.bf16.msra.mxu0 %v648
    %820 = vmatpush.bf16.msra.mxu0 %v646
    %821 = vmatpush.bf16.msra.mxu0 %v644
    %822 = vmatmul.bf16.gmra.mxu0 %v799
    %v823 = vpop.f32.mrf.mxu0
    %v824 = vadd.f32 %v616, %v823
    %v825 = vpop.f32.mrf.mxu0
    %826 = vdwg.mxu0
    %v828 = vrot.slane %v811, 4
    %v830 = vadd.f32 %v495, %v828
    %v831 = vxor.u32 %v830, 2147483648
    %v832 = vmul.f32 %v831, 1.442695
    %v833 = vpow.pop %v832
    %v834 = vadd.f32 %v833, 1.0
    %v835 = vrcp.pop %v834
    %v836 = vmul.f32 %v834, %v835
    %v837 = vsub.f32 1.0, %v836
    %v838 = vmul.f32 %v835, %v837
    %v839 = vadd.f32 %v835, %v838
    %vm840 = vweird.f32 %v834
    %vm841 = vweird.f32 %v835
    %vm842 = vmor %vm840, %vm841
    %v843 = vsel %vm842, %v835, %v839
    %v844 = vand.u32 2147483647, %v834
    %vm845 = vcmp.eq.f32.partialorder %v844, 8.507059e+37
    %v846 = vand.u32 %v834, 2147483648
    %v847 = vor.u32 1.1754944e-38, %v846
    %v848 = vsel %vm845, %v847, %v843
    %v849 = vmul.f32 1.0, %v848
    %v851 = vrot.slane %v824, 4
    %v853 = vmul.f32 %v849, %v851
    %v854 = vadd.f32 %v591, %v853
    %v855 = vtanh.pop %v854
    %v856 = vsub.f32 1.0, %v849
    %858 = vrot.lane.b32.xlu0 %v855, 64
    %v859 = vpop.permute.xlu0 %858
    %v861 = vmul.f32 %v856, %v859
    %v863 = vrot.slane %v792, 6
    %v865 = vmul.f32 %v849, %v863
    %v866 = vadd.f32 %v861, %v865
    %v867 = vpack.c.bf16 %v866, %v866
    %v869 = vrot.slane %v867, 2
    %870 = vrot.lane.b32.xlu0 %v869, 64
    %v871 = vpop.permute.xlu0 %870
    %v873 = vsel %vm659, %v871, 0
    %875 = vmatpush.bf16.msra.mxu0 0
    %876 = vmatpush.bf16.msra.mxu0 0
    %877 = vmatpush.bf16.msra.mxu0 0
    %878 = vmatpush.bf16.msra.mxu0 0
    %879 = vmatpush.bf16.msra.mxu0 %v649
    %880 = vmatpush.bf16.msra.mxu0 %v647
    %881 = vmatpush.bf16.msra.mxu0 %v645
    %882 = vmatpush.bf16.msra.mxu0 %v643
    %883 = vmatmul.bf16.gmra.mxu0 %v873
    %v884 = vpop.f32.mrf.mxu0
    %v885 = vadd.f32 %v615, %v884
    %v886 = vpop.f32.mrf.mxu0
    %887 = vdwg.mxu0
    %888 = vmatpush.bf16.msra.mxu0 0
    %889 = vmatpush.bf16.msra.mxu0 0
    %890 = vmatpush.bf16.msra.mxu0 0
    %891 = vmatpush.bf16.msra.mxu0 0
    %892 = vmatpush.bf16.msra.mxu0 %v650
    %893 = vmatpush.bf16.msra.mxu0 %v648
    %894 = vmatpush.bf16.msra.mxu0 %v646
    %895 = vmatpush.bf16.msra.mxu0 %v644
    %896 = vmatmul.bf16.gmra.mxu0 %v873
    %v897 = vpop.f32.mrf.mxu0
    %v898 = vadd.f32 %v616, %v897
    %v899 = vpop.f32.mrf.mxu0
    %900 = vdwg.mxu0
    %v902 = vrot.slane %v885, 2
    %v904 = vadd.f32 %v495, %v902
    %v905 = vxor.u32 %v904, 2147483648
    %v906 = vmul.f32 %v905, 1.442695
    %v907 = vpow.pop %v906
    %v908 = vadd.f32 %v907, 1.0
    %v909 = vrcp.pop %v908
    %v910 = vmul.f32 %v908, %v909
    %v911 = vsub.f32 1.0, %v910
    %v912 = vmul.f32 %v909, %v911
    %v913 = vadd.f32 %v909, %v912
    %vm914 = vweird.f32 %v908
    %vm915 = vweird.f32 %v909
    %vm916 = vmor %vm914, %vm915
    %v917 = vsel %vm916, %v909, %v913
    %v918 = vand.u32 2147483647, %v908
    %vm919 = vcmp.eq.f32.partialorder %v918, 8.507059e+37
    %v920 = vand.u32 %v908, 2147483648
    %v921 = vor.u32 1.1754944e-38, %v920
    %v922 = vsel %vm919, %v921, %v917
    %v923 = vmul.f32 1.0, %v922
    %v925 = vrot.slane %v898, 2
    %v927 = vmul.f32 %v923, %v925
    %v928 = vadd.f32 %v591, %v927
    %v929 = vtanh.pop %v928
    %v930 = vsub.f32 1.0, %v923
    %932 = vrot.lane.b32.xlu0 %v929, 64
    %v933 = vpop.permute.xlu0 %932
    %v935 = vmul.f32 %v930, %v933
    %v937 = vrot.slane %v866, 6
    %v939 = vmul.f32 %v923, %v937
    %v940 = vadd.f32 %v935, %v939
    %v941 = vpack.c.bf16 %v940, %v940
    %v943 = vrot.slane %v941, 3
    %944 = vrot.lane.b32.xlu0 %v943, 64
    %v945 = vpop.permute.xlu0 %944
    %v947 = vsel %vm659, %v945, 0
    %949 = vmatpush.bf16.msra.mxu0 0
    %950 = vmatpush.bf16.msra.mxu0 0
    %951 = vmatpush.bf16.msra.mxu0 0
    %952 = vmatpush.bf16.msra.mxu0 0
    %953 = vmatpush.bf16.msra.mxu0 %v649
    %954 = vmatpush.bf16.msra.mxu0 %v647
    %955 = vmatpush.bf16.msra.mxu0 %v645
    %956 = vmatpush.bf16.msra.mxu0 %v643
    %957 = vmatmul.bf16.gmra.mxu0 %v947
    %v958 = vpop.f32.mrf.mxu0
    %v959 = vadd.f32 %v615, %v958
    %v960 = vpop.f32.mrf.mxu0
    %961 = vdwg.mxu0
    %962 = vmatpush.bf16.msra.mxu0 0
    %963 = vmatpush.bf16.msra.mxu0 0
    %964 = vmatpush.bf16.msra.mxu0 0
    %965 = vmatpush.bf16.msra.mxu0 0
    %966 = vmatpush.bf16.msra.mxu0 %v650
    %967 = vmatpush.bf16.msra.mxu0 %v648
    %968 = vmatpush.bf16.msra.mxu0 %v646
    %969 = vmatpush.bf16.msra.mxu0 %v644
    %970 = vmatmul.bf16.gmra.mxu0 %v947
    %v971 = vpop.f32.mrf.mxu0
    %v972 = vadd.f32 %v616, %v971
    %v973 = vpop.f32.mrf.mxu0
    %974 = vdwg.mxu0
    %v975 = vadd.f32 %v497, %v959
    %v976 = vxor.u32 %v975, 2147483648
    %v977 = vmul.f32 %v976, 1.442695
    %v978 = vpow.pop %v977
    %v979 = vadd.f32 %v978, 1.0
    %v980 = vrcp.pop %v979
    %v981 = vmul.f32 %v979, %v980
    %v982 = vsub.f32 1.0, %v981
    %v983 = vmul.f32 %v980, %v982
    %v984 = vadd.f32 %v980, %v983
    %vm985 = vweird.f32 %v979
    %vm986 = vweird.f32 %v980
    %vm987 = vmor %vm985, %vm986
    %v988 = vsel %vm987, %v980, %v984
    %v989 = vand.u32 2147483647, %v979
    %vm990 = vcmp.eq.f32.partialorder %v989, 8.507059e+37
    %v991 = vand.u32 %v979, 2147483648
    %v992 = vor.u32 1.1754944e-38, %v991
    %v993 = vsel %vm990, %v992, %v988
    %v994 = vmul.f32 1.0, %v993
    %v995 = vmul.f32 %v994, %v972
    %v996 = vadd.f32 %v593, %v995
    %v997 = vtanh.pop %v996
    %v998 = vsub.f32 1.0, %v994
    %1000 = vrot.lane.b32.xlu0 %v997, 64
    %v1001 = vpop.permute.xlu0 %1000
    %v1003 = vmul.f32 %v998, %v1001
    %v1005 = vrot.slane %v940, 6
    %v1007 = vmul.f32 %v994, %v1005
    %v1008 = vadd.f32 %v1003, %v1007
    %v1009 = vpack.c.bf16 %v1008, %v1008
    %1011 = vrot.lane.b32.xlu0 %v1009, 64
    %v1012 = vpop.permute.xlu0 %1011
    %v1014 = vsel %vm659, %v1012, 0
    %1016 = vmatpush.bf16.msra.mxu0 0
    %1017 = vmatpush.bf16.msra.mxu0 0
    %1018 = vmatpush.bf16.msra.mxu0 0
    %1019 = vmatpush.bf16.msra.mxu0 0
    %1020 = vmatpush.bf16.msra.mxu0 %v649
    %1021 = vmatpush.bf16.msra.mxu0 %v647
    %1022 = vmatpush.bf16.msra.mxu0 %v645
    %1023 = vmatpush.bf16.msra.mxu0 %v643
    %1024 = vmatmul.bf16.gmra.mxu0 %v1014
    %v1025 = vpop.f32.mrf.mxu0
    %v1026 = vadd.f32 %v615, %v1025
    %v1027 = vpop.f32.mrf.mxu0
    %1028 = vdwg.mxu0
    %1029 = vmatpush.bf16.msra.mxu0 0
    %1030 = vmatpush.bf16.msra.mxu0 0
    %1031 = vmatpush.bf16.msra.mxu0 0
    %1032 = vmatpush.bf16.msra.mxu0 0
    %1033 = vmatpush.bf16.msra.mxu0 %v650
    %1034 = vmatpush.bf16.msra.mxu0 %v648
    %1035 = vmatpush.bf16.msra.mxu0 %v646
    %1036 = vmatpush.bf16.msra.mxu0 %v644
    %1037 = vmatmul.bf16.gmra.mxu0 %v1014
    %v1038 = vpop.f32.mrf.mxu0
    %v1039 = vadd.f32 %v616, %v1038
    %v1040 = vpop.f32.mrf.mxu0
    %1041 = vdwg.mxu0
    %v1043 = vrot.slane %v1026, 6
    %v1045 = vadd.f32 %v497, %v1043
    %v1046 = vxor.u32 %v1045, 2147483648
    %v1047 = vmul.f32 %v1046, 1.442695
    %v1048 = vpow.pop %v1047
    %v1049 = vadd.f32 %v1048, 1.0
    %v1050 = vrcp.pop %v1049
    %v1051 = vmul.f32 %v1049, %v1050
    %v1052 = vsub.f32 1.0, %v1051
    %v1053 = vmul.f32 %v1050, %v1052
    %v1054 = vadd.f32 %v1050, %v1053
    %vm1055 = vweird.f32 %v1049
    %vm1056 = vweird.f32 %v1050
    %vm1057 = vmor %vm1055, %vm1056
    %v1058 = vsel %vm1057, %v1050, %v1054
    %v1059 = vand.u32 2147483647, %v1049
    %vm1060 = vcmp.eq.f32.partialorder %v1059, 8.507059e+37
    %v1061 = vand.u32 %v1049, 2147483648
    %v1062 = vor.u32 1.1754944e-38, %v1061
    %v1063 = vsel %vm1060, %v1062, %v1058
    %v1064 = vmul.f32 1.0, %v1063
    %v1066 = vrot.slane %v1039, 6
    %v1068 = vmul.f32 %v1064, %v1066
    %v1069 = vadd.f32 %v593, %v1068
    %v1070 = vtanh.pop %v1069
    %v1071 = vsub.f32 1.0, %v1064
    %1073 = vrot.lane.b32.xlu0 %v1070, 64
    %v1074 = vpop.permute.xlu0 %1073
    %v1076 = vmul.f32 %v1071, %v1074
    %v1078 = vrot.slane %v1008, 6
    %v1080 = vmul.f32 %v1064, %v1078
    %v1081 = vadd.f32 %v1076, %v1080
    %v1082 = vpack.c.bf16 %v1081, %v1081
    %v1084 = vrot.slane %v1082, 1
    %1085 = vrot.lane.b32.xlu0 %v1084, 64
    %v1086 = vpop.permute.xlu0 %1085
    %v1088 = vsel %vm659, %v1086, 0
    %1090 = vmatpush.bf16.msra.mxu0 0
    %1091 = vmatpush.bf16.msra.mxu0 0
    %1092 = vmatpush.bf16.msra.mxu0 0
    %1093 = vmatpush.bf16.msra.mxu0 0
    %1094 = vmatpush.bf16.msra.mxu0 %v649
    %1095 = vmatpush.bf16.msra.mxu0 %v647
    %1096 = vmatpush.bf16.msra.mxu0 %v645
    %1097 = vmatpush.bf16.msra.mxu0 %v643
    %1098 = vmatmul.bf16.gmra.mxu0 %v1088
    %v1099 = vpop.f32.mrf.mxu0
    %v1100 = vadd.f32 %v615, %v1099
    %v1101 = vpop.f32.mrf.mxu0
    %1102 = vdwg.mxu0
    %1103 = vmatpush.bf16.msra.mxu0 0
    %1104 = vmatpush.bf16.msra.mxu0 0
    %1105 = vmatpush.bf16.msra.mxu0 0
    %1106 = vmatpush.bf16.msra.mxu0 0
    %1107 = vmatpush.bf16.msra.mxu0 %v650
    %1108 = vmatpush.bf16.msra.mxu0 %v648
    %1109 = vmatpush.bf16.msra.mxu0 %v646
    %1110 = vmatpush.bf16.msra.mxu0 %v644
    %1111 = vmatmul.bf16.gmra.mxu0 %v1088
    %v1112 = vpop.f32.mrf.mxu0
    %v1113 = vadd.f32 %v616, %v1112
    %v1114 = vpop.f32.mrf.mxu0
    %1115 = vdwg.mxu0
    %v1117 = vrot.slane %v1100, 4
    %v1119 = vadd.f32 %v497, %v1117
    %v1120 = vxor.u32 %v1119, 2147483648
    %v1121 = vmul.f32 %v1120, 1.442695
    %v1122 = vpow.pop %v1121
    %v1123 = vadd.f32 %v1122, 1.0
    %v1124 = vrcp.pop %v1123
    %v1125 = vmul.f32 %v1123, %v1124
    %v1126 = vsub.f32 1.0, %v1125
    %v1127 = vmul.f32 %v1124, %v1126
    %v1128 = vadd.f32 %v1124, %v1127
    %vm1129 = vweird.f32 %v1123
    %vm1130 = vweird.f32 %v1124
    %vm1131 = vmor %vm1129, %vm1130
    %v1132 = vsel %vm1131, %v1124, %v1128
    %v1133 = vand.u32 2147483647, %v1123
    %vm1134 = vcmp.eq.f32.partialorder %v1133, 8.507059e+37
    %v1135 = vand.u32 %v1123, 2147483648
    %v1136 = vor.u32 1.1754944e-38, %v1135
    %v1137 = vsel %vm1134, %v1136, %v1132
    %v1138 = vmul.f32 1.0, %v1137
    %v1140 = vrot.slane %v1113, 4
    %v1142 = vmul.f32 %v1138, %v1140
    %v1143 = vadd.f32 %v593, %v1142
    %v1144 = vtanh.pop %v1143
    %v1145 = vsub.f32 1.0, %v1138
    %1147 = vrot.lane.b32.xlu0 %v1144, 64
    %v1148 = vpop.permute.xlu0 %1147
    %v1150 = vmul.f32 %v1145, %v1148
    %v1152 = vrot.slane %v1081, 6
    %v1154 = vmul.f32 %v1138, %v1152
    %v1155 = vadd.f32 %v1150, %v1154
    %v1156 = vpack.c.bf16 %v1155, %v1155
    %v1158 = vrot.slane %v1156, 2
    %1159 = vrot.lane.b32.xlu0 %v1158, 64
    %v1160 = vpop.permute.xlu0 %1159
    %v1162 = vsel %vm659, %v1160, 0
    %1164 = vmatpush.bf16.msra.mxu0 0
    %1165 = vmatpush.bf16.msra.mxu0 0
    %1166 = vmatpush.bf16.msra.mxu0 0
    %1167 = vmatpush.bf16.msra.mxu0 0
    %1168 = vmatpush.bf16.msra.mxu0 %v649
    %1169 = vmatpush.bf16.msra.mxu0 %v647
    %1170 = vmatpush.bf16.msra.mxu0 %v645
    %1171 = vmatpush.bf16.msra.mxu0 %v643
    %1172 = vmatmul.bf16.gmra.mxu0 %v1162
    %v1173 = vpop.f32.mrf.mxu0
    %v1174 = vadd.f32 %v615, %v1173
    %v1175 = vpop.f32.mrf.mxu0
    %1176 = vdwg.mxu0
    %1177 = vmatpush.bf16.msra.mxu0 0
    %1178 = vmatpush.bf16.msra.mxu0 0
    %1179 = vmatpush.bf16.msra.mxu0 0
    %1180 = vmatpush.bf16.msra.mxu0 0
    %1181 = vmatpush.bf16.msra.mxu0 %v650
    %1182 = vmatpush.bf16.msra.mxu0 %v648
    %1183 = vmatpush.bf16.msra.mxu0 %v646
    %1184 = vmatpush.bf16.msra.mxu0 %v644
    %1185 = vmatmul.bf16.gmra.mxu0 %v1162
    %v1186 = vpop.f32.mrf.mxu0
    %v1187 = vadd.f32 %v616, %v1186
    %v1188 = vpop.f32.mrf.mxu0
    %1189 = vdwg.mxu0
    %v1191 = vrot.slane %v1174, 2
    %v1193 = vadd.f32 %v497, %v1191
    %v1194 = vxor.u32 %v1193, 2147483648
    %v1195 = vmul.f32 %v1194, 1.442695
    %v1196 = vpow.pop %v1195
    %v1197 = vadd.f32 %v1196, 1.0
    %v1198 = vrcp.pop %v1197
    %v1199 = vmul.f32 %v1197, %v1198
    %v1200 = vsub.f32 1.0, %v1199
    %v1201 = vmul.f32 %v1198, %v1200
    %v1202 = vadd.f32 %v1198, %v1201
    %vm1203 = vweird.f32 %v1197
    %vm1204 = vweird.f32 %v1198
    %vm1205 = vmor %vm1203, %vm1204
    %v1206 = vsel %vm1205, %v1198, %v1202
    %v1207 = vand.u32 2147483647, %v1197
    %vm1208 = vcmp.eq.f32.partialorder %v1207, 8.507059e+37
    %v1209 = vand.u32 %v1197, 2147483648
    %v1210 = vor.u32 1.1754944e-38, %v1209
    %v1211 = vsel %vm1208, %v1210, %v1206
    %v1212 = vmul.f32 1.0, %v1211
    %v1214 = vrot.slane %v1187, 2
    %v1216 = vmul.f32 %v1212, %v1214
    %v1217 = vadd.f32 %v593, %v1216
    %v1218 = vtanh.pop %v1217
    %v1219 = vsub.f32 1.0, %v1212
    %1221 = vrot.lane.b32.xlu0 %v1218, 64
    %v1222 = vpop.permute.xlu0 %1221
    %v1224 = vmul.f32 %v1219, %v1222
    %v1226 = vrot.slane %v1155, 6
    %v1228 = vmul.f32 %v1212, %v1226
    %v1229 = vadd.f32 %v1224, %v1228
    %v1230 = vpack.c.bf16 %v1229, %v1229
    %v1232 = vrot.slane %v1230, 3
    %1233 = vrot.lane.b32.xlu0 %v1232, 64
    %v1234 = vpop.permute.xlu0 %1233
    %v1236 = vsel %vm659, %v1234, 0
    %1238 = vmatpush.bf16.msra.mxu0 0
    %1239 = vmatpush.bf16.msra.mxu0 0
    %1240 = vmatpush.bf16.msra.mxu0 0
    %1241 = vmatpush.bf16.msra.mxu0 0
    %1242 = vmatpush.bf16.msra.mxu0 %v649
    %1243 = vmatpush.bf16.msra.mxu0 %v647
    %1244 = vmatpush.bf16.msra.mxu0 %v645
    %1245 = vmatpush.bf16.msra.mxu0 %v643
    %1246 = vmatmul.bf16.gmra.mxu0 %v1236
    %v1247 = vpop.f32.mrf.mxu0
    %v1248 = vadd.f32 %v615, %v1247
    %v1249 = vpop.f32.mrf.mxu0
    %1250 = vdwg.mxu0
    %1251 = vmatpush.bf16.msra.mxu0 0
    %1252 = vmatpush.bf16.msra.mxu0 0
    %1253 = vmatpush.bf16.msra.mxu0 0
    %1254 = vmatpush.bf16.msra.mxu0 0
    %1255 = vmatpush.bf16.msra.mxu0 %v650
    %1256 = vmatpush.bf16.msra.mxu0 %v648
    %1257 = vmatpush.bf16.msra.mxu0 %v646
    %1258 = vmatpush.bf16.msra.mxu0 %v644
    %1259 = vmatmul.bf16.gmra.mxu0 %v1236
    %v1260 = vpop.f32.mrf.mxu0
    %v1261 = vadd.f32 %v616, %v1260
    %v1262 = vpop.f32.mrf.mxu0
    %1263 = vdwg.mxu0
    %v1264 = vadd.f32 %v500, %v1248
    %v1265 = vxor.u32 %v1264, 2147483648
    %v1266 = vmul.f32 %v1265, 1.442695
    %v1267 = vpow.pop %v1266
    %v1268 = vadd.f32 %v1267, 1.0
    %v1269 = vrcp.pop %v1268
    %v1270 = vmul.f32 %v1268, %v1269
    %v1271 = vsub.f32 1.0, %v1270
    %v1272 = vmul.f32 %v1269, %v1271
    %v1273 = vadd.f32 %v1269, %v1272
    %vm1274 = vweird.f32 %v1268
    %vm1275 = vweird.f32 %v1269
    %vm1276 = vmor %vm1274, %vm1275
    %v1277 = vsel %vm1276, %v1269, %v1273
    %v1278 = vand.u32 2147483647, %v1268
    %vm1279 = vcmp.eq.f32.partialorder %v1278, 8.507059e+37
    %v1280 = vand.u32 %v1268, 2147483648
    %v1281 = vor.u32 1.1754944e-38, %v1280
    %v1282 = vsel %vm1279, %v1281, %v1277
    %v1283 = vmul.f32 1.0, %v1282
    %v1284 = vmul.f32 %v1283, %v1261
    %v1285 = vadd.f32 %v596, %v1284
    %v1286 = vtanh.pop %v1285
    %v1287 = vsub.f32 1.0, %v1283
    %1289 = vrot.lane.b32.xlu0 %v1286, 64
    %v1290 = vpop.permute.xlu0 %1289
    %v1292 = vmul.f32 %v1287, %v1290
    %v1294 = vrot.slane %v1229, 6
    %v1296 = vmul.f32 %v1283, %v1294
    %v1297 = vadd.f32 %v1292, %v1296
    %v1298 = vpack.c.bf16 %v1297, %v1297
    %1300 = vrot.lane.b32.xlu0 %v1298, 64
    %v1301 = vpop.permute.xlu0 %1300
    %v1303 = vsel %vm659, %v1301, 0
    %1305 = vmatpush.bf16.msra.mxu0 0
    %1306 = vmatpush.bf16.msra.mxu0 0
    %1307 = vmatpush.bf16.msra.mxu0 0
    %1308 = vmatpush.bf16.msra.mxu0 0
    %1309 = vmatpush.bf16.msra.mxu0 %v649
    %1310 = vmatpush.bf16.msra.mxu0 %v647
    %1311 = vmatpush.bf16.msra.mxu0 %v645
    %1312 = vmatpush.bf16.msra.mxu0 %v643
    %1313 = vmatmul.bf16.gmra.mxu0 %v1303
    %v1314 = vpop.f32.mrf.mxu0
    %v1315 = vadd.f32 %v615, %v1314
    %v1316 = vpop.f32.mrf.mxu0
    %1317 = vdwg.mxu0
    %1318 = vmatpush.bf16.msra.mxu0 0
    %1319 = vmatpush.bf16.msra.mxu0 0
    %1320 = vmatpush.bf16.msra.mxu0 0
    %1321 = vmatpush.bf16.msra.mxu0 0
    %1322 = vmatpush.bf16.msra.mxu0 %v650
    %1323 = vmatpush.bf16.msra.mxu0 %v648
    %1324 = vmatpush.bf16.msra.mxu0 %v646
    %1325 = vmatpush.bf16.msra.mxu0 %v644
    %1326 = vmatmul.bf16.gmra.mxu0 %v1303
    %v1327 = vpop.f32.mrf.mxu0
    %v1328 = vadd.f32 %v616, %v1327
    %v1329 = vpop.f32.mrf.mxu0
    %1330 = vdwg.mxu0
    %v1332 = vrot.slane %v1315, 6
    %v1334 = vadd.f32 %v500, %v1332
    %v1335 = vxor.u32 %v1334, 2147483648
    %v1336 = vmul.f32 %v1335, 1.442695
    %v1337 = vpow.pop %v1336
    %v1338 = vadd.f32 %v1337, 1.0
    %v1339 = vrcp.pop %v1338
    %v1340 = vmul.f32 %v1338, %v1339
    %v1341 = vsub.f32 1.0, %v1340
    %v1342 = vmul.f32 %v1339, %v1341
    %v1343 = vadd.f32 %v1339, %v1342
    %vm1344 = vweird.f32 %v1338
    %vm1345 = vweird.f32 %v1339
    %vm1346 = vmor %vm1344, %vm1345
    %v1347 = vsel %vm1346, %v1339, %v1343
    %v1348 = vand.u32 2147483647, %v1338
    %vm1349 = vcmp.eq.f32.partialorder %v1348, 8.507059e+37
    %v1350 = vand.u32 %v1338, 2147483648
    %v1351 = vor.u32 1.1754944e-38, %v1350
    %v1352 = vsel %vm1349, %v1351, %v1347
    %v1353 = vmul.f32 1.0, %v1352
    %v1355 = vrot.slane %v1328, 6
    %v1357 = vmul.f32 %v1353, %v1355
    %v1358 = vadd.f32 %v596, %v1357
    %v1359 = vtanh.pop %v1358
    %v1360 = vsub.f32 1.0, %v1353
    %1362 = vrot.lane.b32.xlu0 %v1359, 64
    %v1363 = vpop.permute.xlu0 %1362
    %v1365 = vmul.f32 %v1360, %v1363
    %v1367 = vrot.slane %v1297, 6
    %v1369 = vmul.f32 %v1353, %v1367
    %v1370 = vadd.f32 %v1365, %v1369
    %v1371 = vpack.c.bf16 %v1370, %v1370
    %v1373 = vrot.slane %v1371, 1
    %1374 = vrot.lane.b32.xlu0 %v1373, 64
    %v1375 = vpop.permute.xlu0 %1374
    %v1377 = vsel %vm659, %v1375, 0
    %1379 = vmatpush.bf16.msra.mxu0 0
    %1380 = vmatpush.bf16.msra.mxu0 0
    %1381 = vmatpush.bf16.msra.mxu0 0
    %1382 = vmatpush.bf16.msra.mxu0 0
    %1383 = vmatpush.bf16.msra.mxu0 %v649
    %1384 = vmatpush.bf16.msra.mxu0 %v647
    %1385 = vmatpush.bf16.msra.mxu0 %v645
    %1386 = vmatpush.bf16.msra.mxu0 %v643
    %1387 = vmatmul.bf16.gmra.mxu0 %v1377
    %v1388 = vpop.f32.mrf.mxu0
    %v1389 = vadd.f32 %v615, %v1388
    %v1390 = vpop.f32.mrf.mxu0
    %1391 = vdwg.mxu0
    %1392 = vmatpush.bf16.msra.mxu0 0
    %1393 = vmatpush.bf16.msra.mxu0 0
    %1394 = vmatpush.bf16.msra.mxu0 0
    %1395 = vmatpush.bf16.msra.mxu0 0
    %1396 = vmatpush.bf16.msra.mxu0 %v650
    %1397 = vmatpush.bf16.msra.mxu0 %v648
    %1398 = vmatpush.bf16.msra.mxu0 %v646
    %1399 = vmatpush.bf16.msra.mxu0 %v644
    %1400 = vmatmul.bf16.gmra.mxu0 %v1377
    %v1401 = vpop.f32.mrf.mxu0
    %v1402 = vadd.f32 %v616, %v1401
    %v1403 = vpop.f32.mrf.mxu0
    %1404 = vdwg.mxu0
    %v1406 = vrot.slane %v1389, 4
    %v1408 = vadd.f32 %v500, %v1406
    %v1409 = vxor.u32 %v1408, 2147483648
    %v1410 = vmul.f32 %v1409, 1.442695
    %v1411 = vpow.pop %v1410
    %v1412 = vadd.f32 %v1411, 1.0
    %v1413 = vrcp.pop %v1412
    %v1414 = vmul.f32 %v1412, %v1413
    %v1415 = vsub.f32 1.0, %v1414
    %v1416 = vmul.f32 %v1413, %v1415
    %v1417 = vadd.f32 %v1413, %v1416
    %vm1418 = vweird.f32 %v1412
    %vm1419 = vweird.f32 %v1413
    %vm1420 = vmor %vm1418, %vm1419
    %v1421 = vsel %vm1420, %v1413, %v1417
    %v1422 = vand.u32 2147483647, %v1412
    %vm1423 = vcmp.eq.f32.partialorder %v1422, 8.507059e+37
    %v1424 = vand.u32 %v1412, 2147483648
    %v1425 = vor.u32 1.1754944e-38, %v1424
    %v1426 = vsel %vm1423, %v1425, %v1421
    %v1427 = vmul.f32 1.0, %v1426
    %v1429 = vrot.slane %v1402, 4
    %v1431 = vmul.f32 %v1427, %v1429
    %v1432 = vadd.f32 %v596, %v1431
    %v1433 = vtanh.pop %v1432
    %v1434 = vsub.f32 1.0, %v1427
    %1436 = vrot.lane.b32.xlu0 %v1433, 64
    %v1437 = vpop.permute.xlu0 %1436
    %v1439 = vmul.f32 %v1434, %v1437
    %v1441 = vrot.slane %v1370, 6
    %v1443 = vmul.f32 %v1427, %v1441
    %v1444 = vadd.f32 %v1439, %v1443
    %v1445 = vpack.c.bf16 %v1444, %v1444
    %v1447 = vrot.slane %v1445, 2
    %1448 = vrot.lane.b32.xlu0 %v1447, 64
    %v1449 = vpop.permute.xlu0 %1448
    %v1451 = vsel %vm659, %v1449, 0
    %1453 = vmatpush.bf16.msra.mxu0 0
    %1454 = vmatpush.bf16.msra.mxu0 0
    %1455 = vmatpush.bf16.msra.mxu0 0
    %1456 = vmatpush.bf16.msra.mxu0 0
    %1457 = vmatpush.bf16.msra.mxu0 %v649
    %1458 = vmatpush.bf16.msra.mxu0 %v647
    %1459 = vmatpush.bf16.msra.mxu0 %v645
    %1460 = vmatpush.bf16.msra.mxu0 %v643
    %1461 = vmatmul.bf16.gmra.mxu0 %v1451
    %v1462 = vpop.f32.mrf.mxu0
    %v1463 = vadd.f32 %v615, %v1462
    %v1464 = vpop.f32.mrf.mxu0
    %1465 = vdwg.mxu0
    %1466 = vmatpush.bf16.msra.mxu0 0
    %1467 = vmatpush.bf16.msra.mxu0 0
    %1468 = vmatpush.bf16.msra.mxu0 0
    %1469 = vmatpush.bf16.msra.mxu0 0
    %1470 = vmatpush.bf16.msra.mxu0 %v650
    %1471 = vmatpush.bf16.msra.mxu0 %v648
    %1472 = vmatpush.bf16.msra.mxu0 %v646
    %1473 = vmatpush.bf16.msra.mxu0 %v644
    %1474 = vmatmul.bf16.gmra.mxu0 %v1451
    %v1475 = vpop.f32.mrf.mxu0
    %v1476 = vadd.f32 %v616, %v1475
    %v1477 = vpop.f32.mrf.mxu0
    %1478 = vdwg.mxu0
    %v1480 = vrot.slane %v1463, 2
    %v1482 = vadd.f32 %v500, %v1480
    %v1483 = vxor.u32 %v1482, 2147483648
    %v1484 = vmul.f32 %v1483, 1.442695
    %v1485 = vpow.pop %v1484
    %v1486 = vadd.f32 %v1485, 1.0
    %v1487 = vrcp.pop %v1486
    %v1488 = vmul.f32 %v1486, %v1487
    %v1489 = vsub.f32 1.0, %v1488
    %v1490 = vmul.f32 %v1487, %v1489
    %v1491 = vadd.f32 %v1487, %v1490
    %vm1492 = vweird.f32 %v1486
    %vm1493 = vweird.f32 %v1487
    %vm1494 = vmor %vm1492, %vm1493
    %v1495 = vsel %vm1494, %v1487, %v1491
    %v1496 = vand.u32 2147483647, %v1486
    %vm1497 = vcmp.eq.f32.partialorder %v1496, 8.507059e+37
    %v1498 = vand.u32 %v1486, 2147483648
    %v1499 = vor.u32 1.1754944e-38, %v1498
    %v1500 = vsel %vm1497, %v1499, %v1495
    %v1501 = vmul.f32 1.0, %v1500
    %v1503 = vrot.slane %v1476, 2
    %v1505 = vmul.f32 %v1501, %v1503
    %v1506 = vadd.f32 %v596, %v1505
    %v1507 = vtanh.pop %v1506
    %v1508 = vsub.f32 1.0, %v1501
    %1510 = vrot.lane.b32.xlu0 %v1507, 64
    %v1511 = vpop.permute.xlu0 %1510
    %v1513 = vmul.f32 %v1508, %v1511
    %v1515 = vrot.slane %v1444, 6
    %v1517 = vmul.f32 %v1501, %v1515
    %v1518 = vadd.f32 %v1513, %v1517
    %v1519 = vpack.c.bf16 %v1518, %v1518
    %v1521 = vrot.slane %v1519, 3
    %1522 = vrot.lane.b32.xlu0 %v1521, 64
    %v1523 = vpop.permute.xlu0 %1522
    %v1525 = vsel %vm659, %v1523, 0
    %1527 = vmatpush.bf16.msra.mxu0 0
    %1528 = vmatpush.bf16.msra.mxu0 0
    %1529 = vmatpush.bf16.msra.mxu0 0
    %1530 = vmatpush.bf16.msra.mxu0 0
    %1531 = vmatpush.bf16.msra.mxu0 %v649
    %1532 = vmatpush.bf16.msra.mxu0 %v647
    %1533 = vmatpush.bf16.msra.mxu0 %v645
    %1534 = vmatpush.bf16.msra.mxu0 %v643
    %1535 = vmatmul.bf16.gmra.mxu0 %v1525
    %v1536 = vpop.f32.mrf.mxu0
    %v1537 = vadd.f32 %v615, %v1536
    %v1538 = vpop.f32.mrf.mxu0
    %1539 = vdwg.mxu0
    %1540 = vmatpush.bf16.msra.mxu0 0
    %1541 = vmatpush.bf16.msra.mxu0 0
    %1542 = vmatpush.bf16.msra.mxu0 0
    %1543 = vmatpush.bf16.msra.mxu0 0
    %1544 = vmatpush.bf16.msra.mxu0 %v650
    %1545 = vmatpush.bf16.msra.mxu0 %v648
    %1546 = vmatpush.bf16.msra.mxu0 %v646
    %1547 = vmatpush.bf16.msra.mxu0 %v644
    %1548 = vmatmul.bf16.gmra.mxu0 %v1525
    %v1549 = vpop.f32.mrf.mxu0
    %v1550 = vadd.f32 %v616, %v1549
    %v1551 = vpop.f32.mrf.mxu0
    %1552 = vdwg.mxu0
    %v1553 = vadd.f32 %v502, %v1537
    %v1554 = vxor.u32 %v1553, 2147483648
    %v1555 = vmul.f32 %v1554, 1.442695
    %v1556 = vpow.pop %v1555
    %v1557 = vadd.f32 %v1556, 1.0
    %v1558 = vrcp.pop %v1557
    %v1559 = vmul.f32 %v1557, %v1558
    %v1560 = vsub.f32 1.0, %v1559
    %v1561 = vmul.f32 %v1558, %v1560
    %v1562 = vadd.f32 %v1558, %v1561
    %vm1563 = vweird.f32 %v1557
    %vm1564 = vweird.f32 %v1558
    %vm1565 = vmor %vm1563, %vm1564
    %v1566 = vsel %vm1565, %v1558, %v1562
    %v1567 = vand.u32 2147483647, %v1557
    %vm1568 = vcmp.eq.f32.partialorder %v1567, 8.507059e+37
    %v1569 = vand.u32 %v1557, 2147483648
    %v1570 = vor.u32 1.1754944e-38, %v1569
    %v1571 = vsel %vm1568, %v1570, %v1566
    %v1572 = vmul.f32 1.0, %v1571
    %v1573 = vmul.f32 %v1572, %v1550
    %v1574 = vadd.f32 %v598, %v1573
    %v1575 = vtanh.pop %v1574
    %v1576 = vsub.f32 1.0, %v1572
    %1578 = vrot.lane.b32.xlu0 %v1575, 64
    %v1579 = vpop.permute.xlu0 %1578
    %v1581 = vmul.f32 %v1576, %v1579
    %v1583 = vrot.slane %v1518, 6
    %v1585 = vmul.f32 %v1572, %v1583
    %v1586 = vadd.f32 %v1581, %v1585
    %v1587 = vpack.c.bf16 %v1586, %v1586
    %1589 = vrot.lane.b32.xlu0 %v1587, 64
    %v1590 = vpop.permute.xlu0 %1589
    %v1592 = vsel %vm659, %v1590, 0
    %1594 = vmatpush.bf16.msra.mxu0 0
    %1595 = vmatpush.bf16.msra.mxu0 0
    %1596 = vmatpush.bf16.msra.mxu0 0
    %1597 = vmatpush.bf16.msra.mxu0 0
    %1598 = vmatpush.bf16.msra.mxu0 %v649
    %1599 = vmatpush.bf16.msra.mxu0 %v647
    %1600 = vmatpush.bf16.msra.mxu0 %v645
    %1601 = vmatpush.bf16.msra.mxu0 %v643
    %1602 = vmatmul.bf16.gmra.mxu0 %v1592
    %v1603 = vpop.f32.mrf.mxu0
    %v1604 = vadd.f32 %v615, %v1603
    %v1605 = vpop.f32.mrf.mxu0
    %1606 = vdwg.mxu0
    %1607 = vmatpush.bf16.msra.mxu0 0
    %1608 = vmatpush.bf16.msra.mxu0 0
    %1609 = vmatpush.bf16.msra.mxu0 0
    %1610 = vmatpush.bf16.msra.mxu0 0
    %1611 = vmatpush.bf16.msra.mxu0 %v650
    %1612 = vmatpush.bf16.msra.mxu0 %v648
    %1613 = vmatpush.bf16.msra.mxu0 %v646
    %1614 = vmatpush.bf16.msra.mxu0 %v644
    %1615 = vmatmul.bf16.gmra.mxu0 %v1592
    %v1616 = vpop.f32.mrf.mxu0
    %v1617 = vadd.f32 %v616, %v1616
    %v1618 = vpop.f32.mrf.mxu0
    %1619 = vdwg.mxu0
    %v1621 = vrot.slane %v1604, 6
    %v1623 = vadd.f32 %v502, %v1621
    %v1624 = vxor.u32 %v1623, 2147483648
    %v1625 = vmul.f32 %v1624, 1.442695
    %v1626 = vpow.pop %v1625
    %v1627 = vadd.f32 %v1626, 1.0
    %v1628 = vrcp.pop %v1627
    %v1629 = vmul.f32 %v1627, %v1628
    %v1630 = vsub.f32 1.0, %v1629
    %v1631 = vmul.f32 %v1628, %v1630
    %v1632 = vadd.f32 %v1628, %v1631
    %vm1633 = vweird.f32 %v1627
    %vm1634 = vweird.f32 %v1628
    %vm1635 = vmor %vm1633, %vm1634
    %v1636 = vsel %vm1635, %v1628, %v1632
    %v1637 = vand.u32 2147483647, %v1627
    %vm1638 = vcmp.eq.f32.partialorder %v1637, 8.507059e+37
    %v1639 = vand.u32 %v1627, 2147483648
    %v1640 = vor.u32 1.1754944e-38, %v1639
    %v1641 = vsel %vm1638, %v1640, %v1636
    %v1642 = vmul.f32 1.0, %v1641
    %v1644 = vrot.slane %v1617, 6
    %v1646 = vmul.f32 %v1642, %v1644
    %v1647 = vadd.f32 %v598, %v1646
    %v1648 = vtanh.pop %v1647
    %v1649 = vsub.f32 1.0, %v1642
    %1651 = vrot.lane.b32.xlu0 %v1648, 64
    %v1652 = vpop.permute.xlu0 %1651
    %v1654 = vmul.f32 %v1649, %v1652
    %v1656 = vrot.slane %v1586, 6
    %v1658 = vmul.f32 %v1642, %v1656
    %v1659 = vadd.f32 %v1654, %v1658
    %v1660 = vpack.c.bf16 %v1659, %v1659
    %v1662 = vrot.slane %v1660, 1
    %1663 = vrot.lane.b32.xlu0 %v1662, 64
    %v1664 = vpop.permute.xlu0 %1663
    %v1666 = vsel %vm659, %v1664, 0
    %1668 = vmatpush.bf16.msra.mxu0 0
    %1669 = vmatpush.bf16.msra.mxu0 0
    %1670 = vmatpush.bf16.msra.mxu0 0
    %1671 = vmatpush.bf16.msra.mxu0 0
    %1672 = vmatpush.bf16.msra.mxu0 %v649
    %1673 = vmatpush.bf16.msra.mxu0 %v647
    %1674 = vmatpush.bf16.msra.mxu0 %v645
    %1675 = vmatpush.bf16.msra.mxu0 %v643
    %1676 = vmatmul.bf16.gmra.mxu0 %v1666
    %v1677 = vpop.f32.mrf.mxu0
    %v1678 = vadd.f32 %v615, %v1677
    %v1679 = vpop.f32.mrf.mxu0
    %1680 = vdwg.mxu0
    %1681 = vmatpush.bf16.msra.mxu0 0
    %1682 = vmatpush.bf16.msra.mxu0 0
    %1683 = vmatpush.bf16.msra.mxu0 0
    %1684 = vmatpush.bf16.msra.mxu0 0
    %1685 = vmatpush.bf16.msra.mxu0 %v650
    %1686 = vmatpush.bf16.msra.mxu0 %v648
    %1687 = vmatpush.bf16.msra.mxu0 %v646
    %1688 = vmatpush.bf16.msra.mxu0 %v644
    %1689 = vmatmul.bf16.gmra.mxu0 %v1666
    %v1690 = vpop.f32.mrf.mxu0
    %v1691 = vadd.f32 %v616, %v1690
    %v1692 = vpop.f32.mrf.mxu0
    %1693 = vdwg.mxu0
    %v1695 = vrot.slane %v1678, 4
    %v1697 = vadd.f32 %v502, %v1695
    %v1698 = vxor.u32 %v1697, 2147483648
    %v1699 = vmul.f32 %v1698, 1.442695
    %v1700 = vpow.pop %v1699
    %v1701 = vadd.f32 %v1700, 1.0
    %v1702 = vrcp.pop %v1701
    %v1703 = vmul.f32 %v1701, %v1702
    %v1704 = vsub.f32 1.0, %v1703
    %v1705 = vmul.f32 %v1702, %v1704
    %v1706 = vadd.f32 %v1702, %v1705
    %vm1707 = vweird.f32 %v1701
    %vm1708 = vweird.f32 %v1702
    %vm1709 = vmor %vm1707, %vm1708
    %v1710 = vsel %vm1709, %v1702, %v1706
    %v1711 = vand.u32 2147483647, %v1701
    %vm1712 = vcmp.eq.f32.partialorder %v1711, 8.507059e+37
    %v1713 = vand.u32 %v1701, 2147483648
    %v1714 = vor.u32 1.1754944e-38, %v1713
    %v1715 = vsel %vm1712, %v1714, %v1710
    %v1716 = vmul.f32 1.0, %v1715
    %v1718 = vrot.slane %v1691, 4
    %v1720 = vmul.f32 %v1716, %v1718
    %v1721 = vadd.f32 %v598, %v1720
    %v1722 = vtanh.pop %v1721
    %v1723 = vsub.f32 1.0, %v1716
    %1725 = vrot.lane.b32.xlu0 %v1722, 64
    %v1726 = vpop.permute.xlu0 %1725
    %v1728 = vmul.f32 %v1723, %v1726
    %v1730 = vrot.slane %v1659, 6
    %v1732 = vmul.f32 %v1716, %v1730
    %v1733 = vadd.f32 %v1728, %v1732
    %v1734 = vpack.c.bf16 %v1733, %v1733
    %v1736 = vrot.slane %v1734, 2
    %1737 = vrot.lane.b32.xlu0 %v1736, 64
    %v1738 = vpop.permute.xlu0 %1737
    %v1740 = vsel %vm659, %v1738, 0
    %1742 = vmatpush.bf16.msra.mxu0 0
    %1743 = vmatpush.bf16.msra.mxu0 0
    %1744 = vmatpush.bf16.msra.mxu0 0
    %1745 = vmatpush.bf16.msra.mxu0 0
    %1746 = vmatpush.bf16.msra.mxu0 %v649
    %1747 = vmatpush.bf16.msra.mxu0 %v647
    %1748 = vmatpush.bf16.msra.mxu0 %v645
    %1749 = vmatpush.bf16.msra.mxu0 %v643
    %1750 = vmatmul.bf16.gmra.mxu0 %v1740
    %v1751 = vpop.f32.mrf.mxu0
    %v1752 = vadd.f32 %v615, %v1751
    %v1753 = vpop.f32.mrf.mxu0
    %1754 = vdwg.mxu0
    %1755 = vmatpush.bf16.msra.mxu0 0
    %1756 = vmatpush.bf16.msra.mxu0 0
    %1757 = vmatpush.bf16.msra.mxu0 0
    %1758 = vmatpush.bf16.msra.mxu0 0
    %1759 = vmatpush.bf16.msra.mxu0 %v650
    %1760 = vmatpush.bf16.msra.mxu0 %v648
    %1761 = vmatpush.bf16.msra.mxu0 %v646
    %1762 = vmatpush.bf16.msra.mxu0 %v644
    %1763 = vmatmul.bf16.gmra.mxu0 %v1740
    %v1764 = vpop.f32.mrf.mxu0
    %v1765 = vadd.f32 %v616, %v1764
    %v1766 = vpop.f32.mrf.mxu0
    %1767 = vdwg.mxu0
    %v1769 = vrot.slane %v1752, 2
    %v1771 = vadd.f32 %v502, %v1769
    %v1772 = vxor.u32 %v1771, 2147483648
    %v1773 = vmul.f32 %v1772, 1.442695
    %v1774 = vpow.pop %v1773
    %v1775 = vadd.f32 %v1774, 1.0
    %v1776 = vrcp.pop %v1775
    %v1777 = vmul.f32 %v1775, %v1776
    %v1778 = vsub.f32 1.0, %v1777
    %v1779 = vmul.f32 %v1776, %v1778
    %v1780 = vadd.f32 %v1776, %v1779
    %vm1781 = vweird.f32 %v1775
    %vm1782 = vweird.f32 %v1776
    %vm1783 = vmor %vm1781, %vm1782
    %v1784 = vsel %vm1783, %v1776, %v1780
    %v1785 = vand.u32 2147483647, %v1775
    %vm1786 = vcmp.eq.f32.partialorder %v1785, 8.507059e+37
    %v1787 = vand.u32 %v1775, 2147483648
    %v1788 = vor.u32 1.1754944e-38, %v1787
    %v1789 = vsel %vm1786, %v1788, %v1784
    %v1790 = vmul.f32 1.0, %v1789
    %v1792 = vrot.slane %v1765, 2
    %v1794 = vmul.f32 %v1790, %v1792
    %v1795 = vadd.f32 %v598, %v1794
    %v1796 = vtanh.pop %v1795
    %v1797 = vsub.f32 1.0, %v1790
    %1799 = vrot.lane.b32.xlu0 %v1796, 64
    %v1800 = vpop.permute.xlu0 %1799
    %v1802 = vmul.f32 %v1797, %v1800
    %v1804 = vrot.slane %v1733, 6
    %v1806 = vmul.f32 %v1790, %v1804
    %v1807 = vadd.f32 %v1802, %v1806
    %v1808 = vpack.c.bf16 %v1807, %v1807
    %v1810 = vrot.slane %v1808, 3
    %1811 = vrot.lane.b32.xlu0 %v1810, 64
    %v1812 = vpop.permute.xlu0 %1811
    %v1814 = vsel %vm659, %v1812, 0
    %1816 = vmatpush.bf16.msra.mxu0 0
    %1817 = vmatpush.bf16.msra.mxu0 0
    %1818 = vmatpush.bf16.msra.mxu0 0
    %1819 = vmatpush.bf16.msra.mxu0 0
    %1820 = vmatpush.bf16.msra.mxu0 %v649
    %1821 = vmatpush.bf16.msra.mxu0 %v647
    %1822 = vmatpush.bf16.msra.mxu0 %v645
    %1823 = vmatpush.bf16.msra.mxu0 %v643
    %1824 = vmatmul.bf16.gmra.mxu0 %v1814
    %v1825 = vpop.f32.mrf.mxu0
    %v1826 = vadd.f32 %v615, %v1825
    %v1827 = vpop.f32.mrf.mxu0
    %1828 = vdwg.mxu0
    %1829 = vmatpush.bf16.msra.mxu0 0
    %1830 = vmatpush.bf16.msra.mxu0 0
    %1831 = vmatpush.bf16.msra.mxu0 0
    %1832 = vmatpush.bf16.msra.mxu0 0
    %1833 = vmatpush.bf16.msra.mxu0 %v650
    %1834 = vmatpush.bf16.msra.mxu0 %v648
    %1835 = vmatpush.bf16.msra.mxu0 %v646
    %1836 = vmatpush.bf16.msra.mxu0 %v644
    %1837 = vmatmul.bf16.gmra.mxu0 %v1814
    %v1838 = vpop.f32.mrf.mxu0
    %v1839 = vadd.f32 %v616, %v1838
    %v1840 = vpop.f32.mrf.mxu0
    %1841 = vdwg.mxu0
    %v1842 = vadd.f32 %v505, %v1826
    %v1843 = vxor.u32 %v1842, 2147483648
    %v1844 = vmul.f32 %v1843, 1.442695
    %v1845 = vpow.pop %v1844
    %v1846 = vadd.f32 %v1845, 1.0
    %v1847 = vrcp.pop %v1846
    %v1848 = vmul.f32 %v1846, %v1847
    %v1849 = vsub.f32 1.0, %v1848
    %v1850 = vmul.f32 %v1847, %v1849
    %v1851 = vadd.f32 %v1847, %v1850
    %vm1852 = vweird.f32 %v1846
    %vm1853 = vweird.f32 %v1847
    %vm1854 = vmor %vm1852, %vm1853
    %v1855 = vsel %vm1854, %v1847, %v1851
    %v1856 = vand.u32 2147483647, %v1846
    %vm1857 = vcmp.eq.f32.partialorder %v1856, 8.507059e+37
    %v1858 = vand.u32 %v1846, 2147483648
    %v1859 = vor.u32 1.1754944e-38, %v1858
    %v1860 = vsel %vm1857, %v1859, %v1855
    %v1861 = vmul.f32 1.0, %v1860
    %v1862 = vmul.f32 %v1861, %v1839
    %v1863 = vadd.f32 %v601, %v1862
    %v1864 = vtanh.pop %v1863
    %v1865 = vsub.f32 1.0, %v1861
    %1867 = vrot.lane.b32.xlu0 %v1864, 64
    %v1868 = vpop.permute.xlu0 %1867
    %v1870 = vmul.f32 %v1865, %v1868
    %v1872 = vrot.slane %v1807, 6
    %v1874 = vmul.f32 %v1861, %v1872
    %v1875 = vadd.f32 %v1870, %v1874
    %v1876 = vpack.c.bf16 %v1875, %v1875
    %1878 = vrot.lane.b32.xlu0 %v1876, 64
    %v1879 = vpop.permute.xlu0 %1878
    %v1881 = vsel %vm659, %v1879, 0
    %1883 = vmatpush.bf16.msra.mxu0 0
    %1884 = vmatpush.bf16.msra.mxu0 0
    %1885 = vmatpush.bf16.msra.mxu0 0
    %1886 = vmatpush.bf16.msra.mxu0 0
    %1887 = vmatpush.bf16.msra.mxu0 %v649
    %1888 = vmatpush.bf16.msra.mxu0 %v647
    %1889 = vmatpush.bf16.msra.mxu0 %v645
    %1890 = vmatpush.bf16.msra.mxu0 %v643
    %1891 = vmatmul.bf16.gmra.mxu0 %v1881
    %v1892 = vpop.f32.mrf.mxu0
    %v1893 = vadd.f32 %v615, %v1892
    %v1894 = vpop.f32.mrf.mxu0
    %1895 = vdwg.mxu0
    %1896 = vmatpush.bf16.msra.mxu0 0
    %1897 = vmatpush.bf16.msra.mxu0 0
    %1898 = vmatpush.bf16.msra.mxu0 0
    %1899 = vmatpush.bf16.msra.mxu0 0
    %1900 = vmatpush.bf16.msra.mxu0 %v650
    %1901 = vmatpush.bf16.msra.mxu0 %v648
    %1902 = vmatpush.bf16.msra.mxu0 %v646
    %1903 = vmatpush.bf16.msra.mxu0 %v644
    %1904 = vmatmul.bf16.gmra.mxu0 %v1881
    %v1905 = vpop.f32.mrf.mxu0
    %v1906 = vadd.f32 %v616, %v1905
    %v1907 = vpop.f32.mrf.mxu0
    %1908 = vdwg.mxu0
    %v1910 = vrot.slane %v1893, 6
    %v1912 = vadd.f32 %v505, %v1910
    %v1913 = vxor.u32 %v1912, 2147483648
    %v1914 = vmul.f32 %v1913, 1.442695
    %v1915 = vpow.pop %v1914
    %v1916 = vadd.f32 %v1915, 1.0
    %v1917 = vrcp.pop %v1916
    %v1918 = vmul.f32 %v1916, %v1917
    %v1919 = vsub.f32 1.0, %v1918
    %v1920 = vmul.f32 %v1917, %v1919
    %v1921 = vadd.f32 %v1917, %v1920
    %vm1922 = vweird.f32 %v1916
    %vm1923 = vweird.f32 %v1917
    %vm1924 = vmor %vm1922, %vm1923
    %v1925 = vsel %vm1924, %v1917, %v1921
    %v1926 = vand.u32 2147483647, %v1916
    %vm1927 = vcmp.eq.f32.partialorder %v1926, 8.507059e+37
    %v1928 = vand.u32 %v1916, 2147483648
    %v1929 = vor.u32 1.1754944e-38, %v1928
    %v1930 = vsel %vm1927, %v1929, %v1925
    %v1931 = vmul.f32 1.0, %v1930
    %v1933 = vrot.slane %v1906, 6
    %v1935 = vmul.f32 %v1931, %v1933
    %v1936 = vadd.f32 %v601, %v1935
    %v1937 = vtanh.pop %v1936
    %v1938 = vsub.f32 1.0, %v1931
    %1940 = vrot.lane.b32.xlu0 %v1937, 64
    %v1941 = vpop.permute.xlu0 %1940
    %v1943 = vmul.f32 %v1938, %v1941
    %v1945 = vrot.slane %v1875, 6
    %v1947 = vmul.f32 %v1931, %v1945
    %v1948 = vadd.f32 %v1943, %v1947
    %v1949 = vpack.c.bf16 %v1948, %v1948
    %v1951 = vrot.slane %v1949, 1
    %1952 = vrot.lane.b32.xlu0 %v1951, 64
    %v1953 = vpop.permute.xlu0 %1952
    %v1955 = vsel %vm659, %v1953, 0
    %1957 = vmatpush.bf16.msra.mxu0 0
    %1958 = vmatpush.bf16.msra.mxu0 0
    %1959 = vmatpush.bf16.msra.mxu0 0
    %1960 = vmatpush.bf16.msra.mxu0 0
    %1961 = vmatpush.bf16.msra.mxu0 %v649
    %1962 = vmatpush.bf16.msra.mxu0 %v647
    %1963 = vmatpush.bf16.msra.mxu0 %v645
    %1964 = vmatpush.bf16.msra.mxu0 %v643
    %1965 = vmatmul.bf16.gmra.mxu0 %v1955
    %v1966 = vpop.f32.mrf.mxu0
    %v1967 = vadd.f32 %v615, %v1966
    %v1968 = vpop.f32.mrf.mxu0
    %1969 = vdwg.mxu0
    %1970 = vmatpush.bf16.msra.mxu0 0
    %1971 = vmatpush.bf16.msra.mxu0 0
    %1972 = vmatpush.bf16.msra.mxu0 0
    %1973 = vmatpush.bf16.msra.mxu0 0
    %1974 = vmatpush.bf16.msra.mxu0 %v650
    %1975 = vmatpush.bf16.msra.mxu0 %v648
    %1976 = vmatpush.bf16.msra.mxu0 %v646
    %1977 = vmatpush.bf16.msra.mxu0 %v644
    %1978 = vmatmul.bf16.gmra.mxu0 %v1955
    %v1979 = vpop.f32.mrf.mxu0
    %v1980 = vadd.f32 %v616, %v1979
    %v1981 = vpop.f32.mrf.mxu0
    %1982 = vdwg.mxu0
    %v1984 = vrot.slane %v1967, 4
    %v1986 = vadd.f32 %v505, %v1984
    %v1987 = vxor.u32 %v1986, 2147483648
    %v1988 = vmul.f32 %v1987, 1.442695
    %v1989 = vpow.pop %v1988
    %v1990 = vadd.f32 %v1989, 1.0
    %v1991 = vrcp.pop %v1990
    %v1992 = vmul.f32 %v1990, %v1991
    %v1993 = vsub.f32 1.0, %v1992
    %v1994 = vmul.f32 %v1991, %v1993
    %v1995 = vadd.f32 %v1991, %v1994
    %vm1996 = vweird.f32 %v1990
    %vm1997 = vweird.f32 %v1991
    %vm1998 = vmor %vm1996, %vm1997
    %v1999 = vsel %vm1998, %v1991, %v1995
    %v2000 = vand.u32 2147483647, %v1990
    %vm2001 = vcmp.eq.f32.partialorder %v2000, 8.507059e+37
    %v2002 = vand.u32 %v1990, 2147483648
    %v2003 = vor.u32 1.1754944e-38, %v2002
    %v2004 = vsel %vm2001, %v2003, %v1999
    %v2005 = vmul.f32 1.0, %v2004
    %v2007 = vrot.slane %v1980, 4
    %v2009 = vmul.f32 %v2005, %v2007
    %v2010 = vadd.f32 %v601, %v2009
    %v2011 = vtanh.pop %v2010
    %v2012 = vsub.f32 1.0, %v2005
    %2014 = vrot.lane.b32.xlu0 %v2011, 64
    %v2015 = vpop.permute.xlu0 %2014
    %v2017 = vmul.f32 %v2012, %v2015
    %v2019 = vrot.slane %v1948, 6
    %v2021 = vmul.f32 %v2005, %v2019
    %v2022 = vadd.f32 %v2017, %v2021
    %v2023 = vpack.c.bf16 %v2022, %v2022
    %v2025 = vrot.slane %v2023, 2
    %2026 = vrot.lane.b32.xlu0 %v2025, 64
    %v2027 = vpop.permute.xlu0 %2026
    %v2029 = vsel %vm659, %v2027, 0
    %2031 = vmatpush.bf16.msra.mxu0 0
    %2032 = vmatpush.bf16.msra.mxu0 0
    %2033 = vmatpush.bf16.msra.mxu0 0
    %2034 = vmatpush.bf16.msra.mxu0 0
    %2035 = vmatpush.bf16.msra.mxu0 %v649
    %2036 = vmatpush.bf16.msra.mxu0 %v647
    %2037 = vmatpush.bf16.msra.mxu0 %v645
    %2038 = vmatpush.bf16.msra.mxu0 %v643
    %2039 = vmatmul.bf16.gmra.mxu0 %v2029
    %v2040 = vpop.f32.mrf.mxu0
    %v2041 = vadd.f32 %v615, %v2040
    %v2042 = vpop.f32.mrf.mxu0
    %2043 = vdwg.mxu0
    %2044 = vmatpush.bf16.msra.mxu0 0
    %2045 = vmatpush.bf16.msra.mxu0 0
    %2046 = vmatpush.bf16.msra.mxu0 0
    %2047 = vmatpush.bf16.msra.mxu0 0
    %2048 = vmatpush.bf16.msra.mxu0 %v650
    %2049 = vmatpush.bf16.msra.mxu0 %v648
    %2050 = vmatpush.bf16.msra.mxu0 %v646
    %2051 = vmatpush.bf16.msra.mxu0 %v644
    %2052 = vmatmul.bf16.gmra.mxu0 %v2029
    %v2053 = vpop.f32.mrf.mxu0
    %v2054 = vadd.f32 %v616, %v2053
    %v2055 = vpop.f32.mrf.mxu0
    %2056 = vdwg.mxu0
    %v2058 = vrot.slane %v2041, 2
    %v2060 = vadd.f32 %v505, %v2058
    %v2061 = vxor.u32 %v2060, 2147483648
    %v2062 = vmul.f32 %v2061, 1.442695
    %v2063 = vpow.pop %v2062
    %v2064 = vadd.f32 %v2063, 1.0
    %v2065 = vrcp.pop %v2064
    %v2066 = vmul.f32 %v2064, %v2065
    %v2067 = vsub.f32 1.0, %v2066
    %v2068 = vmul.f32 %v2065, %v2067
    %v2069 = vadd.f32 %v2065, %v2068
    %vm2070 = vweird.f32 %v2064
    %vm2071 = vweird.f32 %v2065
    %vm2072 = vmor %vm2070, %vm2071
    %v2073 = vsel %vm2072, %v2065, %v2069
    %v2074 = vand.u32 2147483647, %v2064
    %vm2075 = vcmp.eq.f32.partialorder %v2074, 8.507059e+37
    %v2076 = vand.u32 %v2064, 2147483648
    %v2077 = vor.u32 1.1754944e-38, %v2076
    %v2078 = vsel %vm2075, %v2077, %v2073
    %v2079 = vmul.f32 1.0, %v2078
    %v2081 = vrot.slane %v2054, 2
    %v2083 = vmul.f32 %v2079, %v2081
    %v2084 = vadd.f32 %v601, %v2083
    %v2085 = vtanh.pop %v2084
    %v2086 = vsub.f32 1.0, %v2079
    %2088 = vrot.lane.b32.xlu0 %v2085, 64
    %v2089 = vpop.permute.xlu0 %2088
    %v2091 = vmul.f32 %v2086, %v2089
    %v2093 = vrot.slane %v2022, 6
    %v2095 = vmul.f32 %v2079, %v2093
    %v2096 = vadd.f32 %v2091, %v2095
    %v2097 = vpack.c.bf16 %v2096, %v2096
    %v2099 = vrot.slane %v2097, 3
    %2100 = vrot.lane.b32.xlu0 %v2099, 64
    %v2101 = vpop.permute.xlu0 %2100
    %v2103 = vsel %vm659, %v2101, 0
    %2105 = vmatpush.bf16.msra.mxu0 0
    %2106 = vmatpush.bf16.msra.mxu0 0
    %2107 = vmatpush.bf16.msra.mxu0 0
    %2108 = vmatpush.bf16.msra.mxu0 0
    %2109 = vmatpush.bf16.msra.mxu0 %v649
    %2110 = vmatpush.bf16.msra.mxu0 %v647
    %2111 = vmatpush.bf16.msra.mxu0 %v645
    %2112 = vmatpush.bf16.msra.mxu0 %v643
    %2113 = vmatmul.bf16.gmra.mxu0 %v2103
    %v2114 = vpop.f32.mrf.mxu0
    %v2115 = vadd.f32 %v615, %v2114
    %v2116 = vpop.f32.mrf.mxu0
    %2117 = vdwg.mxu0
    %2118 = vmatpush.bf16.msra.mxu0 0
    %2119 = vmatpush.bf16.msra.mxu0 0
    %2120 = vmatpush.bf16.msra.mxu0 0
    %2121 = vmatpush.bf16.msra.mxu0 0
    %2122 = vmatpush.bf16.msra.mxu0 %v650
    %2123 = vmatpush.bf16.msra.mxu0 %v648
    %2124 = vmatpush.bf16.msra.mxu0 %v646
    %2125 = vmatpush.bf16.msra.mxu0 %v644
    %2126 = vmatmul.bf16.gmra.mxu0 %v2103
    %v2127 = vpop.f32.mrf.mxu0
    %v2128 = vadd.f32 %v616, %v2127
    %v2129 = vpop.f32.mrf.mxu0
    %2130 = vdwg.mxu0
    %v2131 = vadd.f32 %v507, %v2115
    %v2132 = vxor.u32 %v2131, 2147483648
    %v2133 = vmul.f32 %v2132, 1.442695
    %v2134 = vpow.pop %v2133
    %v2135 = vadd.f32 %v2134, 1.0
    %v2136 = vrcp.pop %v2135
    %v2137 = vmul.f32 %v2135, %v2136
    %v2138 = vsub.f32 1.0, %v2137
    %v2139 = vmul.f32 %v2136, %v2138
    %v2140 = vadd.f32 %v2136, %v2139
    %vm2141 = vweird.f32 %v2135
    %vm2142 = vweird.f32 %v2136
    %vm2143 = vmor %vm2141, %vm2142
    %v2144 = vsel %vm2143, %v2136, %v2140
    %v2145 = vand.u32 2147483647, %v2135
    %vm2146 = vcmp.eq.f32.partialorder %v2145, 8.507059e+37
    %v2147 = vand.u32 %v2135, 2147483648
    %v2148 = vor.u32 1.1754944e-38, %v2147
    %v2149 = vsel %vm2146, %v2148, %v2144
    %v2150 = vmul.f32 1.0, %v2149
    %v2151 = vmul.f32 %v2150, %v2128
    %v2152 = vadd.f32 %v603, %v2151
    %v2153 = vtanh.pop %v2152
    %v2154 = vsub.f32 1.0, %v2150
    %2156 = vrot.lane.b32.xlu0 %v2153, 64
    %v2157 = vpop.permute.xlu0 %2156
    %v2159 = vmul.f32 %v2154, %v2157
    %v2161 = vrot.slane %v2096, 6
    %v2163 = vmul.f32 %v2150, %v2161
    %v2164 = vadd.f32 %v2159, %v2163
    %v2165 = vpack.c.bf16 %v2164, %v2164
    %2167 = vrot.lane.b32.xlu0 %v2165, 64
    %v2168 = vpop.permute.xlu0 %2167
    %v2170 = vsel %vm659, %v2168, 0
    %2172 = vmatpush.bf16.msra.mxu0 0
    %2173 = vmatpush.bf16.msra.mxu0 0
    %2174 = vmatpush.bf16.msra.mxu0 0
    %2175 = vmatpush.bf16.msra.mxu0 0
    %2176 = vmatpush.bf16.msra.mxu0 %v649
    %2177 = vmatpush.bf16.msra.mxu0 %v647
    %2178 = vmatpush.bf16.msra.mxu0 %v645
    %2179 = vmatpush.bf16.msra.mxu0 %v643
    %2180 = vmatmul.bf16.gmra.mxu0 %v2170
    %v2181 = vpop.f32.mrf.mxu0
    %v2182 = vadd.f32 %v615, %v2181
    %v2183 = vpop.f32.mrf.mxu0
    %2184 = vdwg.mxu0
    %2185 = vmatpush.bf16.msra.mxu0 0
    %2186 = vmatpush.bf16.msra.mxu0 0
    %2187 = vmatpush.bf16.msra.mxu0 0
    %2188 = vmatpush.bf16.msra.mxu0 0
    %2189 = vmatpush.bf16.msra.mxu0 %v650
    %2190 = vmatpush.bf16.msra.mxu0 %v648
    %2191 = vmatpush.bf16.msra.mxu0 %v646
    %2192 = vmatpush.bf16.msra.mxu0 %v644
    %2193 = vmatmul.bf16.gmra.mxu0 %v2170
    %v2194 = vpop.f32.mrf.mxu0
    %v2195 = vadd.f32 %v616, %v2194
    %v2196 = vpop.f32.mrf.mxu0
    %2197 = vdwg.mxu0
    %v2199 = vrot.slane %v2182, 6
    %v2201 = vadd.f32 %v507, %v2199
    %v2202 = vxor.u32 %v2201, 2147483648
    %v2203 = vmul.f32 %v2202, 1.442695
    %v2204 = vpow.pop %v2203
    %v2205 = vadd.f32 %v2204, 1.0
    %v2206 = vrcp.pop %v2205
    %v2207 = vmul.f32 %v2205, %v2206
    %v2208 = vsub.f32 1.0, %v2207
    %v2209 = vmul.f32 %v2206, %v2208
    %v2210 = vadd.f32 %v2206, %v2209
    %vm2211 = vweird.f32 %v2205
    %vm2212 = vweird.f32 %v2206
    %vm2213 = vmor %vm2211, %vm2212
    %v2214 = vsel %vm2213, %v2206, %v2210
    %v2215 = vand.u32 2147483647, %v2205
    %vm2216 = vcmp.eq.f32.partialorder %v2215, 8.507059e+37
    %v2217 = vand.u32 %v2205, 2147483648
    %v2218 = vor.u32 1.1754944e-38, %v2217
    %v2219 = vsel %vm2216, %v2218, %v2214
    %v2220 = vmul.f32 1.0, %v2219
    %v2222 = vrot.slane %v2195, 6
    %v2224 = vmul.f32 %v2220, %v2222
    %v2225 = vadd.f32 %v603, %v2224
    %v2226 = vtanh.pop %v2225
    %v2227 = vsub.f32 1.0, %v2220
    %2229 = vrot.lane.b32.xlu0 %v2226, 64
    %v2230 = vpop.permute.xlu0 %2229
    %v2232 = vmul.f32 %v2227, %v2230
    %v2234 = vrot.slane %v2164, 6
    %v2236 = vmul.f32 %v2220, %v2234
    %v2237 = vadd.f32 %v2232, %v2236
    %v2238 = vld [vmem:[%s5] sm:$0xff]
    %v2239 = vld [vmem:[%s5 + $0x8] sm:$0xff]
    %v2240 = vld [vmem:[%s5 + $0x10] sm:$0xff]
    %v2241 = vld [vmem:[%s5 + $0x18] sm:$0xff]
    %v2242 = vld [vmem:[%s5 + $0x20] sm:$0xff]
    %v2243 = vld [vmem:[%s5 + $0x28] sm:$0xff]
    %v2244 = vld [vmem:[%s5 + $0x30] sm:$0xff]
    %v2245 = vld [vmem:[%s5 + $0x38] sm:$0xff]
    %v2246 = vld [vmem:[%s6] sm:$0x1]
    %v2248 = vperm.slane %v2246, 0
    %v2251 = vrot.slane %v2237, 2
    %2252 = vrot.lane.b32.xlu0 %v2251, 64
    %v2253 = vpop.permute.xlu0 %2252
    %v2254 = vsel %vm659, %v2253, 0
    %2256 = vmatpush.msra.mxu0 0.0
    %2257 = vmatpush.msra.mxu0 0.0
    %2258 = vmatpush.msra.mxu0 0.0
    %2259 = vmatpush.msra.mxu0 0.0
    %2260 = vmatpush.msra.mxu0 0.0
    %2261 = vmatpush.msra.mxu0 0.0
    %2262 = vmatpush.msra.mxu0 0.0
    %2263 = vmatpush.msra.mxu0 0.0
    %2264 = vmatpush.msra.mxu0 %v2245
    %2265 = vmatpush.msra.mxu0 %v2244
    %2266 = vmatpush.msra.mxu0 %v2243
    %2267 = vmatpush.msra.mxu0 %v2242
    %2268 = vmatpush.msra.mxu0 %v2241
    %2269 = vmatpush.msra.mxu0 %v2240
    %2270 = vmatpush.msra.mxu0 %v2239
    %2271 = vmatpush.msra.mxu0 %v2238
    %2272 = vmatmul.f32.gmra.mxu0 %v2254
    %v2273 = vpop.f32.mrf.mxu0
    %v2274 = vadd.f32 %v2248, %v2273
    %2275 = vdwg.mxu0
    %vm2276 = vcmask 41984
    %2277 = vst.msk [vmem:[#allocation2] sm:$0x3] %vm2276, %v2274
    // Predicated region
    $region30: #{widar_gru_forward.1} parent=1 // pred_check
      _
    $region31: #{widar_gru_forward.1} parent=1 // pred_check_branch
      %2279 = sbr.rel (0) target = $region33
    $region32: #{widar_gru_forward.1} parent=1 // pred_region
      %2281 = vsyncadd [#allocation3], 0
      %s2283 = sshll.u32 [#allocation2], 4
      %s2284 = int_to_ptr.vmem [resolvable:$true] %s2283
      %s2285 = sshll.u32 %s7, 4
      %s2286 = int_to_ptr.hbm [resolvable:$true] %s2285
      %2288 = dma.vmem_to_hbm [thread:$0]  %s2284, 32, %s2286, [#allocation3]
    $region33: #{widar_gru_forward.1} parent=1 // pred_fallthru
      _
    // Predicated region
    $region34: #{widar_gru_forward.1} parent=1 // pred_check
      _
    $region35: #{widar_gru_forward.1} parent=1 // pred_check_branch
      %2290 = sbr.rel (0) target = $region37
    $region36: #{widar_gru_forward.1} parent=1 // pred_region
      %2292 = dma.done [#allocation3], 32
    $region37: #{widar_gru_forward.1} parent=1 // pred_fallthru
      _
    %2293 = vsyncpa [#allocation3], 1

</llo_original>
